<compile_context>
chip_gen: v7x
topology: tpu7x:2x2x1
jax: 0.10.0
libtpu: 0.0.40
codegen_flags: <defaults>
</compile_context>

<pallas_src>
import jax
import jax.numpy as jnp
from jax.experimental import pallas as pl
from jax.experimental.pallas import tpu as pltpu

EPS = 1e-5  # PyTorch BatchNorm2d default eps

# v7x has only 64 MiB physical VMEM (v5e/v6e: 128 MiB).  48 MiB keeps
# double-buffered 512-row tiles comfortable on all three generations while
# still being well above the 16/32 MiB scoped defaults.
_VMEM_LIMIT = 48 * 1024 * 1024
_PREFERRED_TM = 512   # ~85% of HBM roofline on v6e for the elementwise passes
_TK_CAP = 1024        # K-tile cap; keeps (tm,Kp)+(Kp,Cp) inside VMEM for big Cin


def _ru(x, m):
    return ((x + m - 1) // m) * m


def _pad2(a, rows, cols):
    return jnp.pad(a, ((0, rows - a.shape[0]), (0, cols - a.shape[1])))


def _cparams(sem):
    return pltpu.CompilerParams(dimension_semantics=sem,
                                vmem_limit_bytes=_VMEM_LIMIT)


def _pick_tm(M, preferred=_PREFERRED_TM):
    """Pick the M tile: multiple of 16 (bf16 sublane packing), capped by M,
    and >= 2 tiles so v7x's two TensorCores both get work."""
    tm = min(preferred, _ru(M, 16))
    if _ru(M, tm) // tm < 2 and M > 16:
        tm = _ru((M + 1) // 2, 16)
    return tm


# ----------------------------- Pallas kernels ------------------------------

def _conv_stats_kernel(p_ref, w_ref, y_ref, st_ref, acc_ref):
    # conv-as-matmul: bf16 inputs on the native MXU path, f32 accumulation in
    # a VMEM scratch across the K ("arbitrary") grid axis.
    k = pl.program_id(1)

    @pl.when(k == 0)
    def _():
        acc_ref[...] = jnp.zeros_like(acc_ref)

    acc_ref[...] += jnp.dot(p_ref[...], w_ref[...],
                            preferred_element_type=jnp.float32)

    @pl.when(k == pl.num_programs(1) - 1)
    def _():
        y = acc_ref[...]
        # Store conv output in bf16 (halves HBM traffic of the re-read pass);
        # BN partial statistics are taken from the f32 accumulator here so y
        # is not re-read from HBM for them.
        y_ref[...] = y.astype(y_ref.dtype)
        s1 = jnp.sum(y, axis=0, keepdims=True)       # (1, Cp)  sum
        s2 = jnp.sum(y * y, axis=0, keepdims=True)   # (1, Cp)  sum of squares
        st_ref[...] = jnp.concatenate([s1, s2], axis=0)[None]   # (1, 2, Cp)


def _bn_relu_kernel(y_ref, sc_ref, sh_ref, o_ref):
    # relu(gamma*(y-mean)*rsqrt(var+eps)+beta) folded into y*scale + shift.
    y = y_ref[...].astype(jnp.float32) * sc_ref[...] + sh_ref[...]
    o_ref[...] = jnp.maximum(y, 0.0).astype(o_ref.dtype)   # bf16 out -> conv2


def _bn_add_relu_kernel(y_ref, sc_ref, sh_ref, xs_ref, o_ref):
    # Identity skip: plain VPU add (bf16 skip stream, f32 math).
    y = y_ref[...].astype(jnp.float32) * sc_ref[...] + sh_ref[...]
    o_ref[...] = jnp.maximum(y + xs_ref[...].astype(jnp.float32), 0.0)


def _bn_add1x1_relu_kernel(y_ref, sc_ref, sh_ref, xs_ref, w3_ref, b3_ref, o_ref):
    # Projection skip: 1x1 conv folded into a bf16 matmul + bias, fused here.
    y = y_ref[...].astype(jnp.float32) * sc_ref[...] + sh_ref[...]
    skip = jnp.dot(xs_ref[...], w3_ref[...],
                   preferred_element_type=jnp.float32) + b3_ref[...]
    o_ref[...] = jnp.maximum(y + skip, 0.0)


# --------------------------- pallas_call wrappers ---------------------------

def _conv_stats(patches, w, *, tm):
    """(M, K) @ (K, C), tiled over M ("parallel") and K ("arbitrary").
    Returns padded bf16 y (Mp, Cp), per-channel sum / sum-of-squares over the
    real rows (f32), plus padded dims."""
    M, K = patches.shape
    C = w.shape[1]
    Kp, Cp = _ru(K, 128), _ru(C, 128)
    if Kp > 2 * _TK_CAP:
        tk = _TK_CAP
        Kp = _ru(Kp, tk)
    else:
        tk = Kp
    Mp = _ru(M, tm)
    nt, nk = Mp // tm, Kp // tk

    p = _pad2(patches.astype(jnp.bfloat16), Mp, Kp)     # patches already bf16
    wp = _pad2(w, Kp, Cp).astype(jnp.bfloat16)

    y, st = pl.pallas_call(
        _conv_stats_kernel,
        out_shape=(jax.ShapeDtypeStruct((Mp, Cp), jnp.bfloat16),
                   jax.ShapeDtypeStruct((nt, 2, Cp), jnp.float32)),
        grid_spec=pltpu.PrefetchScalarGridSpec(
            num_scalar_prefetch=0,
            grid=(nt, nk),
            in_specs=[pl.BlockSpec((tm, tk), lambda i, k: (i, k)),
                      pl.BlockSpec((tk, Cp), lambda i, k: (k, 0))],
            out_specs=[pl.BlockSpec((tm, Cp), lambda i, k: (i, 0)),
                       pl.BlockSpec((1, 2, Cp), lambda i, k: (i, 0, 0))],
            scratch_shapes=[pltpu.VMEM((tm, Cp), jnp.float32)]),
        compiler_params=_cparams(("parallel", "arbitrary")),
    )(p, wp)

    # Tiny cross-tile reduction of the per-tile partial stats (padded rows are
    # all-zero patches -> contribute nothing).
    ssum = jnp.sum(st[:, 0, :], axis=0)   # (Cp,)
    ssq = jnp.sum(st[:, 1, :], axis=0)    # (Cp,)
    return y, ssum, ssq, Mp, Cp


def _bn_affine(ssum, ssq, count, gamma, beta, cp):
    """Fold training-mode BN (batch stats over `count` rows) into scale/shift."""
    mean = ssum / count
    # NOTE: E[y^2]-E[y]^2 in f32 can lose precision for huge M / large means;
    # fine at this scale (guarded against negative var).
    var = jnp.maximum(ssq / count - mean * mean, 0.0)
    inv = jax.lax.rsqrt(var + EPS)
    g = jnp.pad(gamma.astype(jnp.float32), (0, cp - gamma.shape[0]))
    b = jnp.pad(beta.astype(jnp.float32), (0, cp - beta.shape[0]))
    scale = g * inv
    shift = b - mean * scale
    return scale.reshape(1, cp), shift.reshape(1, cp)


def _apply_bn_relu(y, scale, shift, *, tm):
    Mp, Cp = y.shape
    nt = Mp // tm
    return pl.pallas_call(
        _bn_relu_kernel,
        out_shape=jax.ShapeDtypeStruct((Mp, Cp), jnp.bfloat16),   # feeds conv2
        grid_spec=pltpu.PrefetchScalarGridSpec(
            num_scalar_prefetch=0, grid=(nt,),
            in_specs=[pl.BlockSpec((tm, Cp), lambda i: (i, 0)),
                      pl.BlockSpec((1, Cp), lambda i: (0, 0)),
                      pl.BlockSpec((1, Cp), lambda i: (0, 0))],
            out_specs=pl.BlockSpec((tm, Cp), lambda i: (i, 0))),
        compiler_params=_cparams(("parallel",)),
    )(y, scale, shift)


def _apply_bn_add_relu(y, scale, shift, xs, *, tm):
    Mp, Cp = y.shape
    nt = Mp // tm
    return pl.pallas_call(
        _bn_add_relu_kernel,
        out_shape=jax.ShapeDtypeStruct((Mp, Cp), jnp.float32),
        grid_spec=pltpu.PrefetchScalarGridSpec(
            num_scalar_prefetch=0, grid=(nt,),
            in_specs=[pl.BlockSpec((tm, Cp), lambda i: (i, 0)),
                      pl.BlockSpec((1, Cp), lambda i: (0, 0)),
                      pl.BlockSpec((1, Cp), lambda i: (0, 0)),
                      pl.BlockSpec((tm, Cp), lambda i: (i, 0))],
            out_specs=pl.BlockSpec((tm, Cp), lambda i: (i, 0))),
        compiler_params=_cparams(("parallel",)),
    )(y, scale, shift, xs)


def _apply_bn_add1x1_relu(y, scale, shift, xs, w3, b3, *, tm):
    Mp, Cp = y.shape
    Cinp = xs.shape[1]
    nt = Mp // tm
    return pl.pallas_call(
        _bn_add1x1_relu_kernel,
        out_shape=jax.ShapeDtypeStruct((Mp, Cp), jnp.float32),
        grid_spec=pltpu.PrefetchScalarGridSpec(
            num_scalar_prefetch=0, grid=(nt,),
            in_specs=[pl.BlockSpec((tm, Cp), lambda i: (i, 0)),
                      pl.BlockSpec((1, Cp), lambda i: (0, 0)),
                      pl.BlockSpec((1, Cp), lambda i: (0, 0)),
                      pl.BlockSpec((tm, Cinp), lambda i: (i, 0)),
                      pl.BlockSpec((Cinp, Cp), lambda i: (0, 0)),
                      pl.BlockSpec((1, Cp), lambda i: (0, 0))],
            out_specs=pl.BlockSpec((tm, Cp), lambda i: (i, 0))),
        compiler_params=_cparams(("parallel",)),
    )(y, scale, shift, xs, w3, b3)


# ------------------------------ JAX glue ------------------------------------

def _im2col(x_nhwc, ksize, stride, pad):
    """Extract conv patches (dtype-preserving: call with bf16 input).
    Returns ((N*Ho*Wo, k*k*Cin), (N, Ho, Wo))."""
    N, H, W, Cin = x_nhwc.shape
    xp = jnp.pad(x_nhwc, ((0, 0), (pad, pad), (pad, pad), (0, 0)))
    Ho = (H + 2 * pad - ksize) // stride + 1
    Wo = (W + 2 * pad - ksize) // stride + 1
    cols = []
    for kh in range(ksize):
        for kw in range(ksize):
            cols.append(xp[:, kh:kh + stride * (Ho - 1) + 1:stride,
                           kw:kw + stride * (Wo - 1) + 1:stride, :])
    patches = jnp.concatenate(cols, axis=-1)                 # (N, Ho, Wo, k*k*Cin)
    return patches.reshape(N * Ho * Wo, ksize * ksize * Cin), (N, Ho, Wo)


def _fold_conv_weight(w_oihw):
    """PyTorch (Cout, Cin, kh, kw) -> (kh*kw*Cin, Cout) matching im2col ordering."""
    cout, cin, kh, kw = w_oihw.shape
    return jnp.transpose(w_oihw, (2, 3, 1, 0)).reshape(kh * kw * cin, cout)


def init_residual_params(key, input_channels, num_channels, use_1x1conv):
    ks = jax.random.split(key, 6)
    params = {
        "w1": 0.1 * jax.random.normal(ks[0], (num_channels, input_channels, 3, 3), jnp.float32),
        "b1": 0.1 * jax.random.normal(ks[1], (num_channels,), jnp.float32),
        "w2": 0.1 * jax.random.normal(ks[2], (num_channels, num_channels, 3, 3), jnp.float32),
        "b2": 0.1 * jax.random.normal(ks[3], (num_channels,), jnp.float32),
        # BatchNorm2d default init: weight = 1, bias = 0
        "gamma1": jnp.ones((num_channels,), jnp.float32),
        "beta1": jnp.zeros((num_channels,), jnp.float32),
        "gamma2": jnp.ones((num_channels,), jnp.float32),
        "beta2": jnp.zeros((num_channels,), jnp.float32),
    }
    if use_1x1conv:
        params["w3"] = 0.1 * jax.random.normal(ks[4], (num_channels, input_channels, 1, 1), jnp.float32)
        params["b3"] = 0.1 * jax.random.normal(ks[5], (num_channels,), jnp.float32)
    return params


def residual_forward(x_nchw, params, *, use_1x1conv, strides, tm=None):
    N, Cin, H, W = x_nchw.shape
    C = params["w1"].shape[0]
    # bf16 BEFORE im2col/pad: the 9x-expanded patch tensor (the dominant
    # intermediate) never exists in f32.
    x = jnp.transpose(x_nchw, (0, 2, 3, 1)).astype(jnp.bfloat16)      # NHWC bf16

    # ---- conv1 -> bn1 -> relu ----
    # (b1 omitted on purpose: per-channel bias before training-mode BN is a no-op.)
    p1, (_, Ho, Wo) = _im2col(x, 3, strides, 1)
    M = N * Ho * Wo
    if tm is None:
        tm = _pick_tm(M)
    y1p, s1, q1, Mp, Cp = _conv_stats(p1, _fold_conv_weight(params["w1"]), tm=tm)
    sc1, sh1 = _bn_affine(s1, q1, M, params["gamma1"], params["beta1"], Cp)
    y1p = _apply_bn_relu(y1p, sc1, sh1, tm=tm)            # bf16
    y1 = y1p[:M, :C].reshape(N, Ho, Wo, C)                # bf16

    # ---- conv2 -> bn2 ; skip ; add ; relu ----
    p2, _ = _im2col(y1, 3, 1, 1)
    y2p, s2, q2, _, Cp2 = _conv_stats(p2, _fold_conv_weight(params["w2"]), tm=tm)
    sc2, sh2 = _bn_affine(s2, q2, M, params["gamma2"], params["beta2"], Cp2)

    if use_1x1conv:
        xs = x[:, ::strides, ::strides, :].reshape(M, Cin)            # bf16
        Cinp = _ru(Cin, 128)
        xs_p = _pad2(xs, Mp, Cinp)
        w3_p = _pad2(_fold_conv_weight(params["w3"]), Cinp, Cp2).astype(jnp.bfloat16)
        b3_p = jnp.pad(params["b3"].astype(jnp.float32), (0, Cp2 - C)).reshape(1, Cp2)
        out_p = _apply_bn_add1x1_relu(y2p, sc2, sh2, xs_p, w3_p, b3_p, tm=tm)
    else:
        assert strides == 1 and Cin == C
        xs_p = _pad2(x.reshape(M, Cin), Mp, Cp2)          # bf16 elementwise skip
        out_p = _apply_bn_add_relu(y2p, sc2, sh2, xs_p, tm=tm)

    out = out_p[:M, :C].reshape(N, Ho, Wo, C)
    return jnp.transpose(out, (0, 3, 1, 2)).astype(jnp.float32)       # back to NCHW


# ------------------------- pure-JAX reference (check) ------------------------

def _conv2d_ref(x, w, b, stride, pad):
    y = jax.lax.conv_general_dilated(
        x, w, window_strides=(stride, stride), padding=((pad, pad), (pad, pad)),
        dimension_numbers=("NCHW", "OIHW", "NCHW"),
        precision=jax.lax.Precision.HIGHEST)
    return y + b.reshape(1, -1, 1, 1)


def _bn_ref(y, gamma, beta):
    mean = jnp.mean(y, axis=(0, 2, 3), keepdims=True)
    var = jnp.mean((y - mean) ** 2, axis=(0, 2, 3), keepdims=True)
    return gamma.reshape(1, -1, 1, 1) * (y - mean) / jnp.sqrt(var + EPS) + beta.reshape(1, -1, 1, 1)


def residual_forward_ref(x, params, *, use_1x1conv, strides):
    y = jax.nn.relu(_bn_ref(_conv2d_ref(x, params["w1"], params["b1"], strides, 1),
                            params["gamma1"], params["beta1"]))
    y = _bn_ref(_conv2d_ref(y, params["w2"], params["b2"], 1, 1),
                params["gamma2"], params["beta2"])
    if use_1x1conv:
        x = _conv2d_ref(x, params["w3"], params["b3"], strides, 0)
    return jax.nn.relu(y + x)


# ----------------------------------- main ------------------------------------

if __name__ == "__main__":
    key = jax.random.PRNGKey(0)
    kp, kp2, kx, kx2 = jax.random.split(key, 4)

    fwd = jax.jit(residual_forward, static_argnames=("use_1x1conv", "strides", "tm"))

    # bf16 MXU inputs + bf16 HBM intermediates (f32 accumulation / BN stats)
    # -> tolerance loosened vs the pure-f32 HIGHEST-precision reference.
    ATOL, RTOL = 5e-2, 2e-2

    # Config 1: downsampling block (use_1x1conv=True, stride 2), like ResNet stage entry.
    Cin, C = 4, 8
    params = init_residual_params(kp, Cin, C, use_1x1conv=True)
    x = jax.random.normal(kx, (2, Cin, 16, 16), jnp.float32)
    out = jax.block_until_ready(fwd(x, params, use_1x1conv=True, strides=2))
    ref = residual_forward_ref(x, params, use_1x1conv=True, strides=2)
    assert out.shape == ref.shape == (2, C, 8, 8)
    err = float(jnp.max(jnp.abs(out - ref)))
    assert jnp.allclose(out, ref, atol=ATOL, rtol=RTOL), err

    # Config 2: identity-skip block (use_1x1conv=False, stride 1).
    params2 = init_residual_params(kp2, C, C, use_1x1conv=False)
    x2 = jax.random.normal(kx2, (2, C, 16, 16), jnp.float32)
    out2 = jax.block_until_ready(fwd(x2, params2, use_1x1conv=False, strides=1))
    ref2 = residual_forward_ref(x2, params2, use_1x1conv=False, strides=1)
    assert out2.shape == ref2.shape == (2, C, 16, 16)
    err2 = float(jnp.max(jnp.abs(out2 - ref2)))
    assert jnp.allclose(out2, ref2, atol=ATOL, rtol=RTOL), err2

    print("KERNEL_OK")
</pallas_src>

<mosaic_0001>
module attributes {stable_mosaic.version = 11 : i64} {
  func.func @_bn_relu_kernel(%arg0: i32, %arg1: memref<64x128xbf16, #tpu.memory_space<vmem>>, %arg2: memref<1x128xf32, #tpu.memory_space<vmem>>, %arg3: memref<1x128xf32, #tpu.memory_space<vmem>>, %arg4: memref<64x128xbf16, #tpu.memory_space<vmem>>) attributes {dimension_semantics = [#tpu.dimension_semantics<parallel>], iteration_bounds = array<i64: 2>, scalar_prefetch = 0 : i64, scratch_operands = 0 : i64, tpu.core_type = #tpu.core_type<tc>, window_params = [{transform_indices = @transform_0, window_bounds = array<i64: 64, 128>}, {pipeline_mode = #tpu.pipeline_mode<synchronous>, transform_indices = @transform_1, window_bounds = array<i64: 1, 128>}, {pipeline_mode = #tpu.pipeline_mode<synchronous>, transform_indices = @transform_2, window_bounds = array<i64: 1, 128>}, {transform_indices = @transform_3, window_bounds = array<i64: 64, 128>}]} {
    %c0 = arith.constant 0 : index
    %c0_0 = arith.constant 0 : index
    %0 = vector.load %arg1[%c0, %c0_0] : memref<64x128xbf16, #tpu.memory_space<vmem>>, vector<64x128xbf16>
    %1 = arith.extf %0 : vector<64x128xbf16> to vector<64x128xf32>
    %c0_1 = arith.constant 0 : index
    %c0_2 = arith.constant 0 : index
    %2 = vector.load %arg2[%c0_1, %c0_2] : memref<1x128xf32, #tpu.memory_space<vmem>>, vector<1x128xf32>
    %3 = vector.broadcast %2 : vector<1x128xf32> to vector<64x128xf32>
    %4 = arith.mulf %1, %3 : vector<64x128xf32>
    %c0_3 = arith.constant 0 : index
    %c0_4 = arith.constant 0 : index
    %5 = vector.load %arg3[%c0_3, %c0_4] : memref<1x128xf32, #tpu.memory_space<vmem>>, vector<1x128xf32>
    %6 = vector.broadcast %5 : vector<1x128xf32> to vector<64x128xf32>
    %7 = arith.addf %4, %6 : vector<64x128xf32>
    %cst = arith.constant 0.000000e+00 : f32
    %8 = vector.broadcast %cst : f32 to vector<64x128xf32>
    %9 = arith.maximumf %7, %8 : vector<64x128xf32>
    %10 = arith.truncf %9 : vector<64x128xf32> to vector<64x128xbf16>
    %c0_5 = arith.constant 0 : index
    %c0_6 = arith.constant 0 : index
    %11 = vector.load %arg4[%c0_5, %c0_6] : memref<64x128xbf16, #tpu.memory_space<vmem>>, vector<64x128xbf16>
    tpu.vector_store %arg4[%c0_5, %c0_6], %10 {strides = array<i32>} : memref<64x128xbf16, #tpu.memory_space<vmem>>, vector<64x128xbf16>,
    return
  }
  func.func @transform_0(%arg0: i32) -> (i32, i32) {
    %c0_i32 = arith.constant 0 : i32
    %c0_i32_0 = arith.constant 0 : i32
    return %arg0, %c0_i32 : i32, i32
  }
  func.func @transform_1(%arg0: i32) -> (i32, i32) {
    %c0_i32 = arith.constant 0 : i32
    %c0_i32_0 = arith.constant 0 : i32
    %c0_i32_1 = arith.constant 0 : i32
    return %c0_i32, %c0_i32_0 : i32, i32
  }
  func.func @transform_2(%arg0: i32) -> (i32, i32) {
    %c0_i32 = arith.constant 0 : i32
    %c0_i32_0 = arith.constant 0 : i32
    %c0_i32_1 = arith.constant 0 : i32
    return %c0_i32, %c0_i32_0 : i32, i32
  }
  func.func @transform_3(%arg0: i32) -> (i32, i32) {
    %c0_i32 = arith.constant 0 : i32
    %c0_i32_0 = arith.constant 0 : i32
    return %arg0, %c0_i32 : i32, i32
  }
}

module attributes {stable_mosaic.version = 11 : i64} {
  func.func @_conv_stats_kernel(%arg0: i32, %arg1: i32, %arg2: memref<64x128xbf16, #tpu.memory_space<vmem>>, %arg3: memref<128x128xbf16, #tpu.memory_space<vmem>>, %arg4: memref<64x128xbf16, #tpu.memory_space<vmem>>, %arg5: memref<1x2x128xf32, #tpu.memory_space<vmem>>, %arg6: memref<64x128xf32, #tpu.memory_space<vmem>>) attributes {dimension_semantics = [#tpu.dimension_semantics<parallel>, #tpu.dimension_semantics<arbitrary>], iteration_bounds = array<i64: 2, 1>, scalar_prefetch = 0 : i64, scratch_operands = 1 : i64, tpu.core_type = #tpu.core_type<tc>, window_params = [{transform_indices = @transform_0, window_bounds = array<i64: 64, 128>}, {transform_indices = @transform_1, window_bounds = array<i64: 128, 128>}, {transform_indices = @transform_2, window_bounds = array<i64: 64, 128>}, {transform_indices = @transform_3, window_bounds = array<i64: 1, 2, 128>}]} {
    %c0_i32 = arith.constant 0 : i32
    %0 = arith.cmpi eq, %arg1, %c0_i32 : i32
    %1 = arith.extui %0 : i1 to i32
    %c0_i32_0 = arith.constant 0 : i32
    %2 = arith.cmpi ne, %1, %c0_i32_0 : i32
    scf.if %2 {
      %cst_10 = arith.constant 0.000000e+00 : f32
      %12 = vector.broadcast %cst_10 : f32 to vector<64x128xf32>
      %c0_11 = arith.constant 0 : index
      %c0_12 = arith.constant 0 : index
      %13 = vector.load %arg6[%c0_11, %c0_12] : memref<64x128xf32, #tpu.memory_space<vmem>>, vector<64x128xf32>
      tpu.vector_store %arg6[%c0_11, %c0_12], %12 {strides = array<i32>} : memref<64x128xf32, #tpu.memory_space<vmem>>, vector<64x128xf32>,
    } else {
    }
    %c0 = arith.constant 0 : index
    %c0_1 = arith.constant 0 : index
    %3 = vector.load %arg6[%c0, %c0_1] : memref<64x128xf32, #tpu.memory_space<vmem>>, vector<64x128xf32>
    %c0_2 = arith.constant 0 : index
    %c0_3 = arith.constant 0 : index
    %4 = vector.load %arg2[%c0_2, %c0_3] : memref<64x128xbf16, #tpu.memory_space<vmem>>, vector<64x128xbf16>
    %c0_4 = arith.constant 0 : index
    %c0_5 = arith.constant 0 : index
    %5 = vector.load %arg3[%c0_4, %c0_5] : memref<128x128xbf16, #tpu.memory_space<vmem>>, vector<128x128xbf16>
    %cst = arith.constant dense<0.000000e+00> : vector<64x128xf32>
    %6 = tpu.matmul %4, %5, %cst {dimension_numbers = #tpu.dot_dimension_numbers<[1], [0], [0], [1], [0, 0, 1, 1], [], []>} : vector<64x128xbf16>, vector<128x128xbf16>, vector<64x128xf32> -> vector<64x128xf32>
    %7 = arith.addf %3, %6 : vector<64x128xf32>
    %c0_6 = arith.constant 0 : index
    %c0_7 = arith.constant 0 : index
    %8 = vector.load %arg6[%c0_6, %c0_7] : memref<64x128xf32, #tpu.memory_space<vmem>>, vector<64x128xf32>
    tpu.vector_store %arg6[%c0_6, %c0_7], %7 {strides = array<i32>} : memref<64x128xf32, #tpu.memory_space<vmem>>, vector<64x128xf32>,
    %c0_i32_8 = arith.constant 0 : i32
    %9 = arith.cmpi eq, %arg1, %c0_i32_8 : i32
    %10 = arith.extui %9 : i1 to i32
    %c0_i32_9 = arith.constant 0 : i32
    %11 = arith.cmpi ne, %10, %c0_i32_9 : i32
    scf.if %11 {
      %c0_10 = arith.constant 0 : index
      %c0_11 = arith.constant 0 : index
      %12 = vector.load %arg6[%c0_10, %c0_11] : memref<64x128xf32, #tpu.memory_space<vmem>>, vector<64x128xf32>
      %13 = arith.truncf %12 : vector<64x128xf32> to vector<64x128xbf16>
      %c0_12 = arith.constant 0 : index
      %c0_13 = arith.constant 0 : index
      %14 = vector.load %arg4[%c0_12, %c0_13] : memref<64x128xbf16, #tpu.memory_space<vmem>>, vector<64x128xbf16>
      tpu.vector_store %arg4[%c0_12, %c0_13], %13 {strides = array<i32>} : memref<64x128xbf16, #tpu.memory_space<vmem>>, vector<64x128xbf16>,
      %cst_14 = arith.constant dense<0.000000e+00> : vector<128xf32>
      %15 = vector.multi_reduction <add>, %12, %cst_14 [0] : vector<64x128xf32> to vector<128xf32>
      %16 = vector.shape_cast %15 : vector<128xf32> to vector<1x128xf32>
      %17 = arith.mulf %12, %12 : vector<64x128xf32>
      %cst_15 = arith.constant dense<0.000000e+00> : vector<128xf32>
      %18 = vector.multi_reduction <add>, %17, %cst_15 [0] : vector<64x128xf32> to vector<128xf32>
      %19 = vector.shape_cast %18 : vector<128xf32> to vector<1x128xf32>
      %20 = tpu.concatenate %16, %19 in 0 : vector<1x128xf32>, vector<1x128xf32> -> vector<2x128xf32>
      %21 = vector.shape_cast %20 : vector<2x128xf32> to vector<1x2x128xf32>
      %c0_16 = arith.constant 0 : index
      %c0_17 = arith.constant 0 : index
      %c0_18 = arith.constant 0 : index
      %22 = vector.load %arg5[%c0_16, %c0_17, %c0_18] : memref<1x2x128xf32, #tpu.memory_space<vmem>>, vector<1x2x128xf32>
      tpu.vector_store %arg5[%c0_16, %c0_17, %c0_18], %21 {strides = array<i32>} : memref<1x2x128xf32, #tpu.memory_space<vmem>>, vector<1x2x128xf32>,
    } else {
    }
    return
  }
  func.func @transform_0(%arg0: i32, %arg1: i32) -> (i32, i32) {
    %c0_i32 = arith.constant 0 : i32
    return %arg0, %arg1 : i32, i32
  }
  func.func @transform_1(%arg0: i32, %arg1: i32) -> (i32, i32) {
    %c0_i32 = arith.constant 0 : i32
    %c0_i32_0 = arith.constant 0 : i32
    return %arg1, %c0_i32 : i32, i32
  }
  func.func @transform_2(%arg0: i32, %arg1: i32) -> (i32, i32) {
    %c0_i32 = arith.constant 0 : i32
    %c0_i32_0 = arith.constant 0 : i32
    return %arg0, %c0_i32 : i32, i32
  }
  func.func @transform_3(%arg0: i32, %arg1: i32) -> (i32, i32, i32) {
    %c0_i32 = arith.constant 0 : i32
    %c0_i32_0 = arith.constant 0 : i32
    %c0_i32_1 = arith.constant 0 : i32
    return %arg0, %c0_i32, %c0_i32_0 : i32, i32, i32
  }
}

module attributes {stable_mosaic.version = 11 : i64} {
  func.func @_bn_add1x1_relu_kernel(%arg0: i32, %arg1: memref<64x128xbf16, #tpu.memory_space<vmem>>, %arg2: memref<1x128xf32, #tpu.memory_space<vmem>>, %arg3: memref<1x128xf32, #tpu.memory_space<vmem>>, %arg4: memref<64x128xbf16, #tpu.memory_space<vmem>>, %arg5: memref<128x128xbf16, #tpu.memory_space<vmem>>, %arg6: memref<1x128xf32, #tpu.memory_space<vmem>>, %arg7: memref<64x128xf32, #tpu.memory_space<vmem>>) attributes {dimension_semantics = [#tpu.dimension_semantics<parallel>], iteration_bounds = array<i64: 2>, scalar_prefetch = 0 : i64, scratch_operands = 0 : i64, tpu.core_type = #tpu.core_type<tc>, window_params = [{transform_indices = @transform_0, window_bounds = array<i64: 64, 128>}, {pipeline_mode = #tpu.pipeline_mode<synchronous>, transform_indices = @transform_1, window_bounds = array<i64: 1, 128>}, {pipeline_mode = #tpu.pipeline_mode<synchronous>, transform_indices = @transform_2, window_bounds = array<i64: 1, 128>}, {transform_indices = @transform_3, window_bounds = array<i64: 64, 128>}, {pipeline_mode = #tpu.pipeline_mode<synchronous>, transform_indices = @transform_4, window_bounds = array<i64: 128, 128>}, {pipeline_mode = #tpu.pipeline_mode<synchronous>, transform_indices = @transform_5, window_bounds = array<i64: 1, 128>}, {transform_indices = @transform_6, window_bounds = array<i64: 64, 128>}]} {
    %c0 = arith.constant 0 : index
    %c0_0 = arith.constant 0 : index
    %0 = vector.load %arg1[%c0, %c0_0] : memref<64x128xbf16, #tpu.memory_space<vmem>>, vector<64x128xbf16>
    %1 = arith.extf %0 : vector<64x128xbf16> to vector<64x128xf32>
    %c0_1 = arith.constant 0 : index
    %c0_2 = arith.constant 0 : index
    %2 = vector.load %arg2[%c0_1, %c0_2] : memref<1x128xf32, #tpu.memory_space<vmem>>, vector<1x128xf32>
    %3 = vector.broadcast %2 : vector<1x128xf32> to vector<64x128xf32>
    %4 = arith.mulf %1, %3 : vector<64x128xf32>
    %c0_3 = arith.constant 0 : index
    %c0_4 = arith.constant 0 : index
    %5 = vector.load %arg3[%c0_3, %c0_4] : memref<1x128xf32, #tpu.memory_space<vmem>>, vector<1x128xf32>
    %6 = vector.broadcast %5 : vector<1x128xf32> to vector<64x128xf32>
    %7 = arith.addf %4, %6 : vector<64x128xf32>
    %c0_5 = arith.constant 0 : index
    %c0_6 = arith.constant 0 : index
    %8 = vector.load %arg4[%c0_5, %c0_6] : memref<64x128xbf16, #tpu.memory_space<vmem>>, vector<64x128xbf16>
    %c0_7 = arith.constant 0 : index
    %c0_8 = arith.constant 0 : index
    %9 = vector.load %arg5[%c0_7, %c0_8] : memref<128x128xbf16, #tpu.memory_space<vmem>>, vector<128x128xbf16>
    %cst = arith.constant dense<0.000000e+00> : vector<64x128xf32>
    %10 = tpu.matmul %8, %9, %cst {dimension_numbers = #tpu.dot_dimension_numbers<[1], [0], [0], [1], [0, 0, 1, 1], [], []>} : vector<64x128xbf16>, vector<128x128xbf16>, vector<64x128xf32> -> vector<64x128xf32>
    %c0_9 = arith.constant 0 : index
    %c0_10 = arith.constant 0 : index
    %11 = vector.load %arg6[%c0_9, %c0_10] : memref<1x128xf32, #tpu.memory_space<vmem>>, vector<1x128xf32>
    %12 = vector.broadcast %11 : vector<1x128xf32> to vector<64x128xf32>
    %13 = arith.addf %10, %12 : vector<64x128xf32>
    %14 = arith.addf %7, %13 : vector<64x128xf32>
    %cst_11 = arith.constant 0.000000e+00 : f32
    %15 = vector.broadcast %cst_11 : f32 to vector<64x128xf32>
    %16 = arith.maximumf %14, %15 : vector<64x128xf32>
    %c0_12 = arith.constant 0 : index
    %c0_13 = arith.constant 0 : index
    %17 = vector.load %arg7[%c0_12, %c0_13] : memref<64x128xf32, #tpu.memory_space<vmem>>, vector<64x128xf32>
    tpu.vector_store %arg7[%c0_12, %c0_13], %16 {strides = array<i32>} : memref<64x128xf32, #tpu.memory_space<vmem>>, vector<64x128xf32>,
    return
  }
  func.func @transform_0(%arg0: i32) -> (i32, i32) {
    %c0_i32 = arith.constant 0 : i32
    %c0_i32_0 = arith.constant 0 : i32
    return %arg0, %c0_i32 : i32, i32
  }
  func.func @transform_1(%arg0: i32) -> (i32, i32) {
    %c0_i32 = arith.constant 0 : i32
    %c0_i32_0 = arith.constant 0 : i32
    %c0_i32_1 = arith.constant 0 : i32
    return %c0_i32, %c0_i32_0 : i32, i32
  }
  func.func @transform_2(%arg0: i32) -> (i32, i32) {
    %c0_i32 = arith.constant 0 : i32
    %c0_i32_0 = arith.constant 0 : i32
    %c0_i32_1 = arith.constant 0 : i32
    return %c0_i32, %c0_i32_0 : i32, i32
  }
  func.func @transform_3(%arg0: i32) -> (i32, i32) {
    %c0_i32 = arith.constant 0 : i32
    %c0_i32_0 = arith.constant 0 : i32
    return %arg0, %c0_i32 : i32, i32
  }
  func.func @transform_4(%arg0: i32) -> (i32, i32) {
    %c0_i32 = arith.constant 0 : i32
    %c0_i32_0 = arith.constant 0 : i32
    %c0_i32_1 = arith.constant 0 : i32
    return %c0_i32, %c0_i32_0 : i32, i32
  }
  func.func @transform_5(%arg0: i32) -> (i32, i32) {
    %c0_i32 = arith.constant 0 : i32
    %c0_i32_0 = arith.constant 0 : i32
    %c0_i32_1 = arith.constant 0 : i32
    return %c0_i32, %c0_i32_0 : i32, i32
  }
  func.func @transform_6(%arg0: i32) -> (i32, i32) {
    %c0_i32 = arith.constant 0 : i32
    %c0_i32_0 = arith.constant 0 : i32
    return %arg0, %c0_i32 : i32, i32
  }
}

</mosaic_0001>

<llo_original>
// kernel: residual_forward.5
$region0: #{residual_forward.5}
  #allocation0 [shape = 'u32[]', space=smem, size = 0x4, offset = 0x4, fixed_abs, tag = 'smem constant byte address 0x4 - core index']
  #allocation1 [shape = 'u32[144,128]{1,0:T(1,128)}', space=vmem, size = 0x12000, scoped, tag = 'internal scratch']
  %s0 = inlined_call_operand.vmem [shape: bf16[128,128], index: 0, kind: input, shape index: {}]
  %s1 = inlined_call_operand.vmem [shape: f32[1,128], index: 1, kind: input, shape index: {}]
  %s2 = inlined_call_operand.vmem [shape: f32[1,128], index: 2, kind: input, shape index: {}]
  %s3 = inlined_call_operand.vmem [shape: bf16[128,128], index: 3, kind: output, shape index: {}]
  %s4 = sld [smem:[#allocation0]]
  $region45: #{residual_forward.5} parent=0
    _
  %s6 = ssub.s32 1, %s4
  %s7 = scalar_select 0, %s6, %s4
  loop: start=0, step=1, limit=4
  $region2: #{residual_forward.5} parent=0 // loop_pre_header
    _
  $region3: #{residual_forward.5} parent=0 // loop_header
    %s9 = sphi 0, %s13
    %p10 = scmp.ge.s32.totalorder %s9, 4
    %s19 = sphi 0, %s21
    %s22 = sphi 0, %s19
    %s23 = sphi 0, %s22
    %s39 = sphi 0, %s23
    %s43 = sphi 0, %s43
    %s45 = sphi 0, %s43
    %s46 = sphi 0, %s45
    %s60 = sphi 0, %s46
    %s64 = sphi 0, %s64
    %s66 = sphi 0, %s64
    %s67 = sphi 0, %s66
    %s81 = sphi 0, %s67
    %s87 = sphi 0, %s89
    %s90 = sphi 0, %s87
    %s91 = sphi 0, %s90
    %s107 = sphi 0, %s91
  $region4: #{residual_forward.5} parent=0 // loop_header_branch
    %12 = sbr.rel (%p10) target = $region8
  $region5: #{residual_forward.5} parent=0 // loop_body
    %s14 = ssub.s32 %s9, 1
    %s15 = ssub.s32 %s9, 2
    %s16 = sadd.s32 %s9, 1
    %s17 = ssub.s32 %s9, %s16
    %p18 = scmp.eq.s32.totalorder %s17, 0
    %s20 = sadd.s32 %s19, 1
    %s21 = scalar_select %p18, %s19, %s20
    %p24 = pneg %p18
    %p25 = scmp.eq.s32.totalorder %s9, 1
    %p26 = por %p24, %p25
    %p27 = scmp.ne.s32.totalorder %s19, %s22
    %p28 = scmp.eq.s32.totalorder %s9, 0
    %p29 = por %p27, %p28
    %p30 = scmp.ne.s32.totalorder %s19, %s22
    %p31 = scmp.eq.s32.totalorder %s14, 1
    %p32 = por %p30, %p31
    %p33 = scmp.ne.s32.totalorder %s22, %s23
    %p34 = scmp.eq.s32.totalorder %s14, 0
    %p35 = por %p33, %p34
    %p36 = scmp.ne.s32.totalorder %s22, %s23
    %p37 = scmp.eq.s32.totalorder %s15, 1
    %p38 = por %p36, %p37
    %p40 = scmp.ne.s32.totalorder %s23, %s39
    %p41 = scmp.eq.s32.totalorder %s15, 0
    %p42 = por %p40, %p41
    %s44 = sadd.s32 %s43, 1
    %p47 = scmp.eq.s32.totalorder %s9, 1
    %p48 = scmp.ne.s32.totalorder %s43, %s45
    %p49 = scmp.eq.s32.totalorder %s9, 0
    %p50 = por %p48, %p49
    %p51 = scmp.ne.s32.totalorder %s43, %s45
    %p52 = scmp.eq.s32.totalorder %s14, 1
    %p53 = por %p51, %p52
    %p54 = scmp.ne.s32.totalorder %s45, %s46
    %p55 = scmp.eq.s32.totalorder %s14, 0
    %p56 = por %p54, %p55
    %p57 = scmp.ne.s32.totalorder %s45, %s46
    %p58 = scmp.eq.s32.totalorder %s15, 1
    %p59 = por %p57, %p58
    %p61 = scmp.ne.s32.totalorder %s46, %s60
    %p62 = scmp.eq.s32.totalorder %s15, 0
    %p63 = por %p61, %p62
    %s65 = sadd.s32 %s64, 1
    %p68 = scmp.eq.s32.totalorder %s9, 1
    %p69 = scmp.ne.s32.totalorder %s64, %s66
    %p70 = scmp.eq.s32.totalorder %s9, 0
    %p71 = por %p69, %p70
    %p72 = scmp.ne.s32.totalorder %s64, %s66
    %p73 = scmp.eq.s32.totalorder %s14, 1
    %p74 = por %p72, %p73
    %p75 = scmp.ne.s32.totalorder %s66, %s67
    %p76 = scmp.eq.s32.totalorder %s14, 0
    %p77 = por %p75, %p76
    %p78 = scmp.ne.s32.totalorder %s66, %s67
    %p79 = scmp.eq.s32.totalorder %s15, 1
    %p80 = por %p78, %p79
    %p82 = scmp.ne.s32.totalorder %s67, %s81
    %p83 = scmp.eq.s32.totalorder %s15, 0
    %p84 = por %p82, %p83
    %s85 = ssub.s32 %s9, %s16
    %p86 = scmp.eq.s32.totalorder %s85, 0
    %s88 = sadd.s32 %s87, 1
    %s89 = scalar_select %p86, %s87, %s88
    %p92 = pneg %p86
    %p93 = scmp.eq.s32.totalorder %s9, 1
    %p94 = por %p92, %p93
    %p95 = scmp.ne.s32.totalorder %s87, %s90
    %p96 = scmp.eq.s32.totalorder %s9, 0
    %p97 = por %p95, %p96
    %p98 = scmp.ne.s32.totalorder %s87, %s90
    %p99 = scmp.eq.s32.totalorder %s14, 1
    %p100 = por %p98, %p99
    %p101 = scmp.ne.s32.totalorder %s90, %s91
    %p102 = scmp.eq.s32.totalorder %s14, 0
    %p103 = por %p101, %p102
    %p104 = scmp.ne.s32.totalorder %s90, %s91
    %p105 = scmp.eq.s32.totalorder %s15, 1
    %p106 = por %p104, %p105
    %p108 = scmp.ne.s32.totalorder %s91, %s107
    %p109 = scmp.eq.s32.totalorder %s15, 0
    %p110 = por %p108, %p109
    %p111 = scmp.le.s32.totalorder 1, %s9
    %p112 = scmp.lt.s32.totalorder %s9, 3
    %p113 = pnand %p111, %p112
    %p114 = pneg %p113
    // Predicated region
    $region9: #{residual_forward.5} parent=5 // pred_check
      _
    $region10: #{residual_forward.5} parent=5 // pred_check_branch
      %116 = sbr.rel (%p113) target = $region12
    $region11: #{residual_forward.5} parent=5 // pred_region
      %s117 = ssub.s32 %s9, 1
      // Predicated region
      $region13: #{residual_forward.5} parent=11 // pred_check
        %p118 = pneg %p56
      $region14: #{residual_forward.5} parent=11 // pred_check_branch
        %120 = sbr.rel (%p118) target = $region16
      $region15: #{residual_forward.5} parent=11 // pred_region
        _
      $region16: #{residual_forward.5} parent=11 // pred_fallthru
        _
      // Predicated region
      $region17: #{residual_forward.5} parent=11 // pred_check
        %p121 = pneg %p77
      $region18: #{residual_forward.5} parent=11 // pred_check_branch
        %123 = sbr.rel (%p121) target = $region20
      $region19: #{residual_forward.5} parent=11 // pred_region
        _
      $region20: #{residual_forward.5} parent=11 // pred_fallthru
        _
    $region12: #{residual_forward.5} parent=5 // pred_fallthru
      _
    %p124 = scmp.lt.s32.totalorder %s9, 2
    // Predicated region
    $region21: #{residual_forward.5} parent=5 // pred_check
      %p125 = pneg %p124
    $region22: #{residual_forward.5} parent=5 // pred_check_branch
      %127 = sbr.rel (%p125) target = $region24
    $region23: #{residual_forward.5} parent=5 // pred_region
      // Predicated region
      $region25: #{residual_forward.5} parent=23 // pred_check
        %p128 = pneg %p29
      $region26: #{residual_forward.5} parent=23 // pred_check_branch
        %130 = sbr.rel (%p128) target = $region28
      $region27: #{residual_forward.5} parent=23 // pred_region
        %s131 = smul.u32 8, %s9
        %p132 = scmp.lt.s32.totalorder %s131, 15
        %s133 = scalar_select %p132, %s131, 15
        %s134 = smul.addr %s133, 4
        %s135 = scalar_lea.vmem %s0, %s134
        %s136 = smul.u32 8, %s9
      $region28: #{residual_forward.5} parent=23 // pred_fallthru
        _
    $region24: #{residual_forward.5} parent=5 // pred_fallthru
      _
    %p137 = scmp.le.s32.totalorder 1, %s9
    %p138 = scmp.lt.s32.totalorder %s9, 3
    %p139 = pnand %p137, %p138
    %p140 = pneg %p139
    // Predicated region
    $region29: #{residual_forward.5} parent=5 // pred_check
      _
    $region30: #{residual_forward.5} parent=5 // pred_check_branch
      %142 = sbr.rel (%p139) target = $region32
    $region31: #{residual_forward.5} parent=5 // pred_region
      %s143 = ssub.s32 %s9, 1
      %s144 = smul.u32 8, %s14
      %p145 = scmp.lt.s32.totalorder %s144, 15
      %s146 = scalar_select %p145, %s144, 15
      %s147 = smul.addr %s146, 4
      %s148 = scalar_lea.vmem %s0, %s147
      %p149 = pneg %p35
      %p150 = pneg %p32
      %p151 = pneg %p56
      %p152 = pneg %p53
      %p153 = pneg %p77
      %p154 = pneg %p74
      %p155 = pneg %p103
      %p156 = pneg %p100
      %s157 = smul.u32 8, %s14
      %p158 = scmp.lt.s32.totalorder %s157, 15
      %s159 = scalar_select %p158, %s157, 15
      %s160 = smul.addr %s159, 4
      %s161 = scalar_lea.vmem %s3, %s160
      %s162 = smul.u32 8, %s14
      %p163 = scmp.lt.s32.totalorder %s162, 15
      %s164 = scalar_select %p163, %s162, 15
      %s165 = smul.addr %s164, 4
      %s166 = scalar_lea.vmem %s0, %s165
      %s167 = smul.u32 8, %s14
      %s168 = smul.u32 8, %s14
      %p169 = scmp.lt.s32.totalorder %s168, 15
      %s170 = scalar_select %p169, %s168, 15
      %s171 = smul.addr %s170, 4
      %s172 = scalar_lea.vmem %s3, %s171
      %s173 = smul.u32 8, %s14
      %v174 = vld [vmem:[%s166] sm:$0xf]
      %v175 = vld [vmem:[%s166 + $0x4] sm:$0xf]
      %v176 = vld [vmem:[%s166 + $0x8] sm:$0xf]
      %v177 = vld [vmem:[%s166 + $0xc] sm:$0xf]
      %v178 = vld [vmem:[%s166 + $0x10] sm:$0xf]
      %v179 = vld [vmem:[%s166 + $0x14] sm:$0xf]
      %v180 = vld [vmem:[%s166 + $0x18] sm:$0xf]
      %v181 = vld [vmem:[%s166 + $0x1c] sm:$0xf]
      %v182 = vunpack.c.l.bf16 %v174
      %v183 = vunpack.c.l.bf16 %v175
      %v184 = vunpack.c.l.bf16 %v176
      %v185 = vunpack.c.l.bf16 %v177
      %v186 = vunpack.c.l.bf16 %v178
      %v187 = vunpack.c.l.bf16 %v179
      %v188 = vunpack.c.l.bf16 %v180
      %v189 = vunpack.c.l.bf16 %v181
      %v190 = vld [vmem:[%s1] sm:$0x1]
      %v192 = vlaneseq
      %v193 = vshrl.u32 %v192, 7
      %v194 = vsub.s32 0, %v193
      %v195 = vrot.slane %v190, %v194
      %v197 = vmul.f32 %v182, %v195
      %v198 = vmul.f32 %v183, %v195
      %v199 = vmul.f32 %v184, %v195
      %v200 = vmul.f32 %v185, %v195
      %v201 = vmul.f32 %v186, %v195
      %v202 = vmul.f32 %v187, %v195
      %v203 = vmul.f32 %v188, %v195
      %v204 = vmul.f32 %v189, %v195
      %v205 = vld [vmem:[%s2] sm:$0x1]
      %v207 = vlaneseq
      %v208 = vshrl.u32 %v207, 7
      %v209 = vsub.s32 0, %v208
      %v210 = vrot.slane %v205, %v209
      %v212 = vadd.f32 %v197, %v210
      %v213 = vadd.f32 %v198, %v210
      %v214 = vadd.f32 %v199, %v210
      %v215 = vadd.f32 %v200, %v210
      %v216 = vadd.f32 %v201, %v210
      %v217 = vadd.f32 %v202, %v210
      %v218 = vadd.f32 %v203, %v210
      %v219 = vadd.f32 %v204, %v210
      %v220 = vmax.f32 %v212, 0.0
      %v221 = vmax.f32 %v213, 0.0
      %v222 = vmax.f32 %v214, 0.0
      %v223 = vmax.f32 %v215, 0.0
      %v224 = vmax.f32 %v216, 0.0
      %v225 = vmax.f32 %v217, 0.0
      %v226 = vmax.f32 %v218, 0.0
      %v227 = vmax.f32 %v219, 0.0
      %v228 = vpack.c.bf16 %v221, %v220
      %v229 = vpack.c.bf16 %v223, %v222
      %v230 = vpack.c.bf16 %v225, %v224
      %v231 = vpack.c.bf16 %v227, %v226
      %v236 = vunpack.c.l.b16 %v228
      %v237 = vunpack.c.h.b16 %v228
      %v238 = vunpack.c.l.b16 %v229
      %v239 = vunpack.c.h.b16 %v229
      %v240 = vunpack.c.l.b16 %v230
      %v241 = vunpack.c.h.b16 %v230
      %v242 = vunpack.c.l.b16 %v231
      %v243 = vunpack.c.h.b16 %v231
      %v244 = vpack.c.b16 %v236, %v236
      %v245 = vpack.c.b16 %v237, %v237
      %v246 = vpack.c.b16 %v238, %v238
      %v247 = vpack.c.b16 %v239, %v239
      %v248 = vpack.c.b16 %v240, %v240
      %v249 = vpack.c.b16 %v241, %v241
      %v250 = vpack.c.b16 %v242, %v242
      %v251 = vpack.c.b16 %v243, %v243
      %260 = vst [vmem:[%s172] sm:$0xf] %v244
      %261 = vst [vmem:[%s172 + $0x4] sm:$0xf] %v245
      %262 = vst [vmem:[%s172 + $0x8] sm:$0xf] %v246
      %263 = vst [vmem:[%s172 + $0xc] sm:$0xf] %v247
      %264 = vst [vmem:[%s172 + $0x10] sm:$0xf] %v248
      %265 = vst [vmem:[%s172 + $0x14] sm:$0xf] %v249
      %266 = vst [vmem:[%s172 + $0x18] sm:$0xf] %v250
      %267 = vst [vmem:[%s172 + $0x1c] sm:$0xf] %v251
      %s268 = smul.u32 8, %s14
      %p269 = scmp.lt.s32.totalorder %s268, 15
      %s270 = scalar_select %p269, %s268, 15
      %s271 = smul.addr %s270, 4
      %s272 = scalar_lea.vmem %s3, %s271
      // Predicated region
      $region33: #{residual_forward.5} parent=31 // pred_check
        %p273 = pneg %p100
      $region34: #{residual_forward.5} parent=31 // pred_check_branch
        %275 = sbr.rel (%p273) target = $region36
      $region35: #{residual_forward.5} parent=31 // pred_region
        %s276 = smul.u32 8, %s14
      $region36: #{residual_forward.5} parent=31 // pred_fallthru
        _
    $region32: #{residual_forward.5} parent=5 // pred_fallthru
      _
    %p277 = scmp.le.s32.totalorder 2, %s9
    // Predicated region
    $region37: #{residual_forward.5} parent=5 // pred_check
      %p278 = pneg %p277
    $region38: #{residual_forward.5} parent=5 // pred_check_branch
      %280 = sbr.rel (%p278) target = $region40
    $region39: #{residual_forward.5} parent=5 // pred_region
      %s281 = ssub.s32 %s9, 2
      // Predicated region
      $region41: #{residual_forward.5} parent=39 // pred_check
        %p282 = pneg %p106
      $region42: #{residual_forward.5} parent=39 // pred_check_branch
        %284 = sbr.rel (%p282) target = $region44
      $region43: #{residual_forward.5} parent=39 // pred_region
        %s285 = smul.u32 8, %s15
        %p286 = scmp.lt.s32.totalorder %s285, 15
        %s287 = scalar_select %p286, %s285, 15
        %s288 = smul.addr %s287, 4
        %s289 = scalar_lea.vmem %s3, %s288
      $region44: #{residual_forward.5} parent=39 // pred_fallthru
        _
    $region40: #{residual_forward.5} parent=5 // pred_fallthru
      _
  $region6: #{residual_forward.5} parent=0 // loop_footer
    %s13 = sadd.s32 1, %s9
  $region7: #{residual_forward.5} parent=0 // loop_footer_branch
    %8 = sbr.rel target = $region3
  $region8: #{residual_forward.5} parent=0 // loop_exit
    _

// kernel: residual_forward.4
$region0: #{residual_forward.4}
  #allocation0 [shape = 'u32[]', space=smem, size = 0x4, offset = 0x4, fixed_abs, tag = 'smem constant byte address 0x4 - core index']
  #allocation1 [shape = 'u32[144,128]{1,0:T(1,128)}', space=vmem, size = 0x12000, scoped, tag = 'internal scratch']
  #allocation2 [shape = 'f32[64,128]{1,0:T(8,128)}', space=vmem, size = 0x8000, scoped, tag = 'scratch operand']
  %s0 = inlined_call_operand.vmem [shape: bf16[128,128], index: 0, kind: input, shape index: {}]
  %s1 = inlined_call_operand.vmem [shape: bf16[128,128], index: 1, kind: input, shape index: {}]
  %s2 = inlined_call_operand.vmem [shape: bf16[128,128], index: 2, kind: output, shape index: {0}]
  %s3 = inlined_call_operand.vmem [shape: f32[2,2,128], index: 3, kind: output, shape index: {1}]
  %4 = xla_tuple %s2, %s3
  %s5 = sld [smem:[#allocation0]]
  $region57: #{residual_forward.4} parent=0
    _
  %s7 = ssub.s32 1, %s5
  %s8 = scalar_select 0, %s7, %s5
  loop: start=0, step=1, limit=4
  $region2: #{residual_forward.4} parent=0 // loop_pre_header
    _
  $region3: #{residual_forward.4} parent=0 // loop_header
    %s10 = sphi 0, %s14
    %p11 = scmp.ge.s32.totalorder %s10, 4
    %s17 = sphi 0, %s29
    %s18 = sphi 0, %s25
    %s19 = sphi 0, %s17
    %s20 = sphi 0, %s18
    %s21 = sphi 0, %s19
    %s22 = sphi 0, %s20
    %s34 = sphi 0, %s36
    %s37 = sphi 0, %s34
    %s38 = sphi 0, %s37
    %s54 = sphi 0, %s38
    %s60 = sphi 0, %s62
    %s63 = sphi 0, %s60
    %s64 = sphi 0, %s63
    %s80 = sphi 0, %s64
    %s86 = sphi 0, %s88
    %s89 = sphi 0, %s86
    %s90 = sphi 0, %s89
    %s106 = sphi 0, %s90
    %s112 = sphi 0, %s114
    %s115 = sphi 0, %s112
    %s116 = sphi 0, %s115
    %s132 = sphi 0, %s116
  $region4: #{residual_forward.4} parent=0 // loop_header_branch
    %13 = sbr.rel (%p11) target = $region8
  $region5: #{residual_forward.4} parent=0 // loop_body
    %s15 = ssub.s32 %s10, 1
    %s16 = ssub.s32 %s10, 2
    %s23 = sadd.s32 1, %s18
    %p24 = scmp.ge.s32.totalorder %s23, 1
    %s25 = scalar_select %p24, 0, %s23
    %s26 = sadd.s32 1, %s17
    %s27 = scalar_select %p24, %s26, %s17
    %p28 = scmp.ge.s32.totalorder %s27, 2
    %s29 = scalar_select %p28, 0, %s27
    %s30 = ssub.s32 %s17, %s29
    %s31 = ssub.s32 %s18, %s25
    %s32 = sor.u32 %s30, %s31
    %p33 = scmp.eq.s32.totalorder %s32, 0
    %s35 = sadd.s32 %s34, 1
    %s36 = scalar_select %p33, %s34, %s35
    %p39 = pneg %p33
    %p40 = scmp.eq.s32.totalorder %s10, 1
    %p41 = por %p39, %p40
    %p42 = scmp.ne.s32.totalorder %s34, %s37
    %p43 = scmp.eq.s32.totalorder %s10, 0
    %p44 = por %p42, %p43
    %p45 = scmp.ne.s32.totalorder %s34, %s37
    %p46 = scmp.eq.s32.totalorder %s15, 1
    %p47 = por %p45, %p46
    %p48 = scmp.ne.s32.totalorder %s37, %s38
    %p49 = scmp.eq.s32.totalorder %s15, 0
    %p50 = por %p48, %p49
    %p51 = scmp.ne.s32.totalorder %s37, %s38
    %p52 = scmp.eq.s32.totalorder %s16, 1
    %p53 = por %p51, %p52
    %p55 = scmp.ne.s32.totalorder %s38, %s54
    %p56 = scmp.eq.s32.totalorder %s16, 0
    %p57 = por %p55, %p56
    %s58 = ssub.s32 %s18, %s25
    %p59 = scmp.eq.s32.totalorder %s58, 0
    %s61 = sadd.s32 %s60, 1
    %s62 = scalar_select %p59, %s60, %s61
    %p65 = pneg %p59
    %p66 = scmp.eq.s32.totalorder %s10, 1
    %p67 = por %p65, %p66
    %p68 = scmp.ne.s32.totalorder %s60, %s63
    %p69 = scmp.eq.s32.totalorder %s10, 0
    %p70 = por %p68, %p69
    %p71 = scmp.ne.s32.totalorder %s60, %s63
    %p72 = scmp.eq.s32.totalorder %s15, 1
    %p73 = por %p71, %p72
    %p74 = scmp.ne.s32.totalorder %s63, %s64
    %p75 = scmp.eq.s32.totalorder %s15, 0
    %p76 = por %p74, %p75
    %p77 = scmp.ne.s32.totalorder %s63, %s64
    %p78 = scmp.eq.s32.totalorder %s16, 1
    %p79 = por %p77, %p78
    %p81 = scmp.ne.s32.totalorder %s64, %s80
    %p82 = scmp.eq.s32.totalorder %s16, 0
    %p83 = por %p81, %p82
    %s84 = ssub.s32 %s17, %s29
    %p85 = scmp.eq.s32.totalorder %s84, 0
    %s87 = sadd.s32 %s86, 1
    %s88 = scalar_select %p85, %s86, %s87
    %p91 = pneg %p85
    %p92 = scmp.eq.s32.totalorder %s10, 1
    %p93 = por %p91, %p92
    %p94 = scmp.ne.s32.totalorder %s86, %s89
    %p95 = scmp.eq.s32.totalorder %s10, 0
    %p96 = por %p94, %p95
    %p97 = scmp.ne.s32.totalorder %s86, %s89
    %p98 = scmp.eq.s32.totalorder %s15, 1
    %p99 = por %p97, %p98
    %p100 = scmp.ne.s32.totalorder %s89, %s90
    %p101 = scmp.eq.s32.totalorder %s15, 0
    %p102 = por %p100, %p101
    %p103 = scmp.ne.s32.totalorder %s89, %s90
    %p104 = scmp.eq.s32.totalorder %s16, 1
    %p105 = por %p103, %p104
    %p107 = scmp.ne.s32.totalorder %s90, %s106
    %p108 = scmp.eq.s32.totalorder %s16, 0
    %p109 = por %p107, %p108
    %s110 = ssub.s32 %s17, %s29
    %p111 = scmp.eq.s32.totalorder %s110, 0
    %s113 = sadd.s32 %s112, 1
    %s114 = scalar_select %p111, %s112, %s113
    %p117 = pneg %p111
    %p118 = scmp.eq.s32.totalorder %s10, 1
    %p119 = por %p117, %p118
    %p120 = scmp.ne.s32.totalorder %s112, %s115
    %p121 = scmp.eq.s32.totalorder %s10, 0
    %p122 = por %p120, %p121
    %p123 = scmp.ne.s32.totalorder %s112, %s115
    %p124 = scmp.eq.s32.totalorder %s15, 1
    %p125 = por %p123, %p124
    %p126 = scmp.ne.s32.totalorder %s115, %s116
    %p127 = scmp.eq.s32.totalorder %s15, 0
    %p128 = por %p126, %p127
    %p129 = scmp.ne.s32.totalorder %s115, %s116
    %p130 = scmp.eq.s32.totalorder %s16, 1
    %p131 = por %p129, %p130
    %p133 = scmp.ne.s32.totalorder %s116, %s132
    %p134 = scmp.eq.s32.totalorder %s16, 0
    %p135 = por %p133, %p134
    %p136 = scmp.le.s32.totalorder 1, %s10
    %p137 = scmp.lt.s32.totalorder %s10, 3
    %p138 = pnand %p136, %p137
    %p139 = pneg %p138
    // Predicated region
    $region9: #{residual_forward.4} parent=5 // pred_check
      _
    $region10: #{residual_forward.4} parent=5 // pred_check_branch
      %141 = sbr.rel (%p138) target = $region12
    $region11: #{residual_forward.4} parent=5 // pred_region
      %s142 = ssub.s32 %s10, 1
      // Predicated region
      $region13: #{residual_forward.4} parent=11 // pred_check
        %p143 = pneg %p76
      $region14: #{residual_forward.4} parent=11 // pred_check_branch
        %145 = sbr.rel (%p143) target = $region16
      $region15: #{residual_forward.4} parent=11 // pred_region
        %s146 = smul.u32 16, %s20
        %p147 = scmp.lt.s32.totalorder %s146, 15
        %s148 = scalar_select %p147, %s146, 15
        %s149 = smul.addr %s148, 4
        %s150 = scalar_lea.vmem %s1, %s149
        %s151 = smul.u32 16, %s20
      $region16: #{residual_forward.4} parent=11 // pred_fallthru
        _
    $region12: #{residual_forward.4} parent=5 // pred_fallthru
      _
    %p152 = scmp.lt.s32.totalorder %s10, 2
    // Predicated region
    $region17: #{residual_forward.4} parent=5 // pred_check
      %p153 = pneg %p152
    $region18: #{residual_forward.4} parent=5 // pred_check_branch
      %155 = sbr.rel (%p153) target = $region20
    $region19: #{residual_forward.4} parent=5 // pred_region
      // Predicated region
      $region21: #{residual_forward.4} parent=19 // pred_check
        %p156 = pneg %p44
      $region22: #{residual_forward.4} parent=19 // pred_check_branch
        %158 = sbr.rel (%p156) target = $region24
      $region23: #{residual_forward.4} parent=19 // pred_region
        %s159 = smul.u32 8, %s17
        %p160 = scmp.lt.s32.totalorder %s159, 15
        %s161 = scalar_select %p160, %s159, 15
        %p162 = scmp.lt.s32.totalorder %s18, 0
        %s163 = scalar_select %p162, %s18, 0
        %s164 = sadd.s32 %s163, %s161
        %s165 = smul.addr %s164, 4
        %s166 = scalar_lea.vmem %s0, %s165
        %s167 = smul.u32 8, %s17
      $region24: #{residual_forward.4} parent=19 // pred_fallthru
        _
    $region20: #{residual_forward.4} parent=5 // pred_fallthru
      _
    %p168 = scmp.le.s32.totalorder 1, %s10
    %p169 = scmp.lt.s32.totalorder %s10, 3
    %p170 = pnand %p168, %p169
    %p171 = pneg %p170
    // Predicated region
    $region25: #{residual_forward.4} parent=5 // pred_check
      _
    $region26: #{residual_forward.4} parent=5 // pred_check_branch
      %173 = sbr.rel (%p170) target = $region28
    $region27: #{residual_forward.4} parent=5 // pred_region
      %s174 = ssub.s32 %s10, 1
      %s175 = smul.u32 8, %s19
      %p176 = scmp.lt.s32.totalorder %s175, 15
      %s177 = scalar_select %p176, %s175, 15
      %p178 = scmp.lt.s32.totalorder %s20, 0
      %s179 = scalar_select %p178, %s20, 0
      %s180 = sadd.s32 %s179, %s177
      %s181 = smul.addr %s180, 4
      %s182 = scalar_lea.vmem %s0, %s181
      %p183 = pneg %p50
      %p184 = pneg %p47
      %s185 = smul.u32 16, %s20
      %p186 = scmp.lt.s32.totalorder %s185, 15
      %s187 = scalar_select %p186, %s185, 15
      %s188 = smul.addr %s187, 4
      %s189 = scalar_lea.vmem %s1, %s188
      %p190 = pneg %p76
      %p191 = pneg %p73
      %p192 = pneg %p102
      %p193 = pneg %p99
      %s194 = smul.u32 8, %s19
      %p195 = scmp.lt.s32.totalorder %s194, 15
      %s196 = scalar_select %p195, %s194, 15
      %s197 = smul.addr %s196, 4
      %s198 = scalar_lea.vmem %s2, %s197
      %p199 = pneg %p128
      %p200 = pneg %p125
      %p201 = scmp.lt.s32.totalorder %s19, 1
      %s202 = scalar_select %p201, %s19, 1
      %s203 = smul.addr %s202, 2
      %s204 = scalar_lea.vmem %s3, %s203
      %s205 = smul.u32 8, %s19
      %p206 = scmp.lt.s32.totalorder %s205, 15
      %s207 = scalar_select %p206, %s205, 15
      %p208 = scmp.lt.s32.totalorder %s20, 0
      %s209 = scalar_select %p208, %s20, 0
      %s210 = sadd.s32 %s209, %s207
      %s211 = smul.addr %s210, 4
      %s212 = scalar_lea.vmem %s0, %s211
      %s213 = smul.u32 8, %s19
      %s214 = smul.u32 16, %s20
      %p215 = scmp.lt.s32.totalorder %s214, 15
      %s216 = scalar_select %p215, %s214, 15
      %s217 = smul.addr %s216, 4
      %s218 = scalar_lea.vmem %s1, %s217
      %s219 = smul.u32 16, %s20
      %s220 = smul.u32 8, %s19
      %p221 = scmp.lt.s32.totalorder %s220, 15
      %s222 = scalar_select %p221, %s220, 15
      %s223 = smul.addr %s222, 4
      %s224 = scalar_lea.vmem %s2, %s223
      %s225 = smul.u32 8, %s19
      %p226 = scmp.lt.s32.totalorder %s19, 1
      %s227 = scalar_select %p226, %s19, 1
      %s228 = smul.addr %s227, 2
      %s229 = scalar_lea.vmem %s3, %s228
      %p231 = scmp.eq.s32.totalorder %s20, 0
      // Predicated region
      $region29: #{residual_forward.4} parent=27 // pred_check
        %p232 = pneg %p231
      $region30: #{residual_forward.4} parent=27 // pred_check_branch
        %234 = sbr.rel (%p232) target = $region32
      $region31: #{residual_forward.4} parent=27 // pred_region
        %235 = vst [vmem:[#allocation2] sm:$0xff] 0.0
        %236 = vst [vmem:[#allocation2 + $0x8] sm:$0xff] 0.0
        %237 = vst [vmem:[#allocation2 + $0x10] sm:$0xff] 0.0
        %238 = vst [vmem:[#allocation2 + $0x18] sm:$0xff] 0.0
        %239 = vst [vmem:[#allocation2 + $0x20] sm:$0xff] 0.0
        %240 = vst [vmem:[#allocation2 + $0x28] sm:$0xff] 0.0
        %241 = vst [vmem:[#allocation2 + $0x30] sm:$0xff] 0.0
        %242 = vst [vmem:[#allocation2 + $0x38] sm:$0xff] 0.0
      $region32: #{residual_forward.4} parent=27 // pred_fallthru
        _
      %v243 = vld [vmem:[#allocation2] sm:$0xff]
      %v244 = vld [vmem:[#allocation2 + $0x8] sm:$0xff]
      %v245 = vld [vmem:[#allocation2 + $0x10] sm:$0xff]
      %v246 = vld [vmem:[#allocation2 + $0x18] sm:$0xff]
      %v247 = vld [vmem:[#allocation2 + $0x20] sm:$0xff]
      %v248 = vld [vmem:[#allocation2 + $0x28] sm:$0xff]
      %v249 = vld [vmem:[#allocation2 + $0x30] sm:$0xff]
      %v250 = vld [vmem:[#allocation2 + $0x38] sm:$0xff]
      %v251 = vld [vmem:[%s212] sm:$0xf]
      %v252 = vld [vmem:[%s212 + $0x4] sm:$0xf]
      %v253 = vld [vmem:[%s212 + $0x8] sm:$0xf]
      %v254 = vld [vmem:[%s212 + $0xc] sm:$0xf]
      %v255 = vld [vmem:[%s212 + $0x10] sm:$0xf]
      %v256 = vld [vmem:[%s212 + $0x14] sm:$0xf]
      %v257 = vld [vmem:[%s212 + $0x18] sm:$0xf]
      %v258 = vld [vmem:[%s212 + $0x1c] sm:$0xf]
      %v259 = vld [vmem:[%s218] sm:$0xf]
      %v260 = vld [vmem:[%s218 + $0x4] sm:$0xf]
      %v261 = vld [vmem:[%s218 + $0x8] sm:$0xf]
      %v262 = vld [vmem:[%s218 + $0xc] sm:$0xf]
      %v263 = vld [vmem:[%s218 + $0x10] sm:$0xf]
      %v264 = vld [vmem:[%s218 + $0x14] sm:$0xf]
      %v265 = vld [vmem:[%s218 + $0x18] sm:$0xf]
      %v266 = vld [vmem:[%s218 + $0x1c] sm:$0xf]
      %v267 = vld [vmem:[%s218 + $0x20] sm:$0xf]
      %v268 = vld [vmem:[%s218 + $0x24] sm:$0xf]
      %v269 = vld [vmem:[%s218 + $0x28] sm:$0xf]
      %v270 = vld [vmem:[%s218 + $0x2c] sm:$0xf]
      %v271 = vld [vmem:[%s218 + $0x30] sm:$0xf]
      %v272 = vld [vmem:[%s218 + $0x34] sm:$0xf]
      %v273 = vld [vmem:[%s218 + $0x38] sm:$0xf]
      %v274 = vld [vmem:[%s218 + $0x3c] sm:$0xf]
      %v283 = vunpack.c.l.b16 %v251
      %v284 = vunpack.c.l.b16 %v252
      %v285 = vunpack.c.l.b16 %v253
      %v286 = vunpack.c.l.b16 %v254
      %v287 = vunpack.c.l.b16 %v255
      %v288 = vunpack.c.l.b16 %v256
      %v289 = vunpack.c.l.b16 %v257
      %v290 = vunpack.c.l.b16 %v258
      %v291 = vpack.c.b16 %v284, %v283
      %v292 = vpack.c.b16 %v286, %v285
      %v293 = vpack.c.b16 %v288, %v287
      %v294 = vpack.c.b16 %v290, %v289
      %v315 = vunpack.c.l.b16 %v259
      %v316 = vunpack.c.l.b16 %v260
      %v317 = vunpack.c.l.b16 %v261
      %v318 = vunpack.c.l.b16 %v262
      %v319 = vunpack.c.l.b16 %v263
      %v320 = vunpack.c.l.b16 %v264
      %v321 = vunpack.c.l.b16 %v265
      %v322 = vunpack.c.l.b16 %v266
      %v323 = vunpack.c.l.b16 %v267
      %v324 = vunpack.c.l.b16 %v268
      %v325 = vunpack.c.l.b16 %v269
      %v326 = vunpack.c.l.b16 %v270
      %v327 = vunpack.c.l.b16 %v271
      %v328 = vunpack.c.l.b16 %v272
      %v329 = vunpack.c.l.b16 %v273
      %v330 = vunpack.c.l.b16 %v274
      %v331 = vpack.c.b16 %v316, %v315
      %v332 = vpack.c.b16 %v318, %v317
      %v333 = vpack.c.b16 %v320, %v319
      %v334 = vpack.c.b16 %v322, %v321
      %v335 = vpack.c.b16 %v324, %v323
      %v336 = vpack.c.b16 %v326, %v325
      %v337 = vpack.c.b16 %v328, %v327
      %v338 = vpack.c.b16 %v330, %v329
      %347 = vmatprep.subr.bf16.mxu0 0
      %348 = vmatpush1.bf16.msra.mxu0 %v331
      %349 = vmatprep.subr.bf16.mxu0 0
      %350 = vmatpush1.bf16.msra.mxu0 %v332
      %351 = vmatprep.subr.bf16.mxu0 0
      %352 = vmatpush1.bf16.msra.mxu0 %v333
      %353 = vmatprep.subr.bf16.mxu0 0
      %354 = vmatpush1.bf16.msra.mxu0 %v334
      %355 = vmatprep.subr.bf16.mxu0 0
      %356 = vmatpush1.bf16.msra.mxu0 %v335
      %357 = vmatprep.subr.bf16.mxu0 0
      %358 = vmatpush1.bf16.msra.mxu0 %v336
      %359 = vmatprep.subr.bf16.mxu0 0
      %360 = vmatpush1.bf16.msra.mxu0 %v337
      %361 = vmatprep.subr.bf16.mxu0 0
      %362 = vmatpush1.bf16.msra.mxu0 %v338
      %363 = vmatprep.subr.bf16.mxu0 0
      %364 = vmatpush1.bf16.msra.mxu0 0
      %365 = vmatprep.subr.bf16.mxu0 0
      %366 = vmatpush1.bf16.msra.mxu0 0
      %367 = vmatprep.subr.bf16.mxu0 0
      %368 = vmatpush1.bf16.msra.mxu0 0
      %369 = vmatprep.subr.bf16.mxu0 0
      %370 = vmatpush1.bf16.msra.mxu0 0
      %371 = vmatprep.subr.bf16.mxu0 0
      %372 = vmatpush1.bf16.msra.mxu0 0
      %373 = vmatprep.subr.bf16.mxu0 0
      %374 = vmatpush1.bf16.msra.mxu0 0
      %375 = vmatprep.subr.bf16.mxu0 0
      %376 = vmatpush1.bf16.msra.mxu0 0
      %377 = vmatprep.subr.bf16.mxu0 0
      %378 = vmatpush1.bf16.msra.mxu0 0
      %379 = vmatprep.mubr.bf16.mxu0 0
      %380 = vmatmul.mubr.bf16.gmra.mrb[0].mxu0 %v291
      %v381 = vpop.f32.mrb[0].mxu0
      %v382 = vadd.f32 0.0, %v381
      %v383 = vpop.f32.mrb[0].mxu0
      %v384 = vpop.f32.mrb[0].mxu0
      %v385 = vadd.f32 0.0, %v384
      %v386 = vpop.f32.mrb[0].mxu0
      %387 = vmatprep.mubr.bf16.mxu0 0
      %388 = vmatmul.mubr.bf16.gmra.mrb[0].mxu0 %v292
      %v389 = vpop.f32.mrb[0].mxu0
      %v390 = vadd.f32 0.0, %v389
      %v391 = vpop.f32.mrb[0].mxu0
      %v392 = vpop.f32.mrb[0].mxu0
      %v393 = vadd.f32 0.0, %v392
      %v394 = vpop.f32.mrb[0].mxu0
      %395 = vmatprep.mubr.bf16.mxu0 0
      %396 = vmatmul.mubr.bf16.gmra.mrb[0].mxu0 %v293
      %v397 = vpop.f32.mrb[0].mxu0
      %v398 = vadd.f32 0.0, %v397
      %v399 = vpop.f32.mrb[0].mxu0
      %v400 = vpop.f32.mrb[0].mxu0
      %v401 = vadd.f32 0.0, %v400
      %v402 = vpop.f32.mrb[0].mxu0
      %403 = vmatprep.mubr.bf16.mxu0 0
      %404 = vmatmul.mubr.bf16.gmra.mrb[0].mxu0 %v294
      %v405 = vpop.f32.mrb[0].mxu0
      %v406 = vadd.f32 0.0, %v405
      %v407 = vpop.f32.mrb[0].mxu0
      %v408 = vpop.f32.mrb[0].mxu0
      %v409 = vadd.f32 0.0, %v408
      %v410 = vpop.f32.mrb[0].mxu0
      %411 = vdwg.mxu0
      %v412 = vadd.f32 %v243, %v382
      %v413 = vadd.f32 %v244, %v385
      %v414 = vadd.f32 %v245, %v390
      %v415 = vadd.f32 %v246, %v393
      %v416 = vadd.f32 %v247, %v398
      %v417 = vadd.f32 %v248, %v401
      %v418 = vadd.f32 %v249, %v406
      %v419 = vadd.f32 %v250, %v409
      %420 = vst [vmem:[#allocation2] sm:$0xff] %v412
      %421 = vst [vmem:[#allocation2 + $0x8] sm:$0xff] %v413
      %422 = vst [vmem:[#allocation2 + $0x10] sm:$0xff] %v414
      %423 = vst [vmem:[#allocation2 + $0x18] sm:$0xff] %v415
      %424 = vst [vmem:[#allocation2 + $0x20] sm:$0xff] %v416
      %425 = vst [vmem:[#allocation2 + $0x28] sm:$0xff] %v417
      %426 = vst [vmem:[#allocation2 + $0x30] sm:$0xff] %v418
      %427 = vst [vmem:[#allocation2 + $0x38] sm:$0xff] %v419
      // Predicated region
      $region33: #{residual_forward.4} parent=27 // pred_check
        %p428 = pneg %p231
      $region34: #{residual_forward.4} parent=27 // pred_check_branch
        %430 = sbr.rel (%p428) target = $region36
      $region35: #{residual_forward.4} parent=27 // pred_region
        %v431 = vld [vmem:[#allocation2] sm:$0xff]
        %v432 = vld [vmem:[#allocation2 + $0x8] sm:$0xff]
        %v433 = vld [vmem:[#allocation2 + $0x10] sm:$0xff]
        %v434 = vld [vmem:[#allocation2 + $0x18] sm:$0xff]
        %v435 = vld [vmem:[#allocation2 + $0x20] sm:$0xff]
        %v436 = vld [vmem:[#allocation2 + $0x28] sm:$0xff]
        %v437 = vld [vmem:[#allocation2 + $0x30] sm:$0xff]
        %v438 = vld [vmem:[#allocation2 + $0x38] sm:$0xff]
        %v439 = vpack.c.bf16 %v432, %v431
        %v440 = vpack.c.bf16 %v434, %v433
        %v441 = vpack.c.bf16 %v436, %v435
        %v442 = vpack.c.bf16 %v438, %v437
        %v447 = vunpack.c.l.b16 %v439
        %v448 = vunpack.c.h.b16 %v439
        %v449 = vunpack.c.l.b16 %v440
        %v450 = vunpack.c.h.b16 %v440
        %v451 = vunpack.c.l.b16 %v441
        %v452 = vunpack.c.h.b16 %v441
        %v453 = vunpack.c.l.b16 %v442
        %v454 = vunpack.c.h.b16 %v442
        %v455 = vpack.c.b16 %v447, %v447
        %v456 = vpack.c.b16 %v448, %v448
        %v457 = vpack.c.b16 %v449, %v449
        %v458 = vpack.c.b16 %v450, %v450
        %v459 = vpack.c.b16 %v451, %v451
        %v460 = vpack.c.b16 %v452, %v452
        %v461 = vpack.c.b16 %v453, %v453
        %v462 = vpack.c.b16 %v454, %v454
        %471 = vst [vmem:[%s224] sm:$0xf] %v455
        %472 = vst [vmem:[%s224 + $0x4] sm:$0xf] %v456
        %473 = vst [vmem:[%s224 + $0x8] sm:$0xf] %v457
        %474 = vst [vmem:[%s224 + $0xc] sm:$0xf] %v458
        %475 = vst [vmem:[%s224 + $0x10] sm:$0xf] %v459
        %476 = vst [vmem:[%s224 + $0x14] sm:$0xf] %v460
        %477 = vst [vmem:[%s224 + $0x18] sm:$0xf] %v461
        %478 = vst [vmem:[%s224 + $0x1c] sm:$0xf] %v462
        %v479 = vadd.f32 %v431, %v432
        %v480 = vadd.f32 %v479, %v433
        %v481 = vadd.f32 %v480, %v434
        %v482 = vadd.f32 %v481, %v435
        %v483 = vadd.f32 %v482, %v436
        %v484 = vadd.f32 %v483, %v437
        %v485 = vadd.f32 %v484, %v438
        %v486 = vrot.slane %v485, 4
        %v487 = vadd.f32 %v485, %v486
        %v488 = vrot.slane %v487, 2
        %v489 = vadd.f32 %v487, %v488
        %v490 = vrot.slane %v489, 1
        %v491 = vadd.f32 %v489, %v490
        %v492 = vmul.f32 %v431, %v431
        %v493 = vmul.f32 %v432, %v432
        %v494 = vmul.f32 %v433, %v433
        %v495 = vmul.f32 %v434, %v434
        %v496 = vmul.f32 %v435, %v435
        %v497 = vmul.f32 %v436, %v436
        %v498 = vmul.f32 %v437, %v437
        %v499 = vmul.f32 %v438, %v438
        %v500 = vadd.f32 %v492, %v493
        %v501 = vadd.f32 %v500, %v494
        %v502 = vadd.f32 %v501, %v495
        %v503 = vadd.f32 %v502, %v496
        %v504 = vadd.f32 %v503, %v497
        %v505 = vadd.f32 %v504, %v498
        %v506 = vadd.f32 %v505, %v499
        %v507 = vrot.slane %v506, 4
        %v508 = vadd.f32 %v506, %v507
        %v509 = vrot.slane %v508, 2
        %v510 = vadd.f32 %v508, %v509
        %v511 = vrot.slane %v510, 1
        %v512 = vadd.f32 %v510, %v511
        %vm513 = vcmask 1040384
        %v514 = vsel %vm513, %v491, %v512
        %515 = vst [vmem:[%s229] sm:$0x3] %v514
      $region36: #{residual_forward.4} parent=27 // pred_fallthru
        _
      %s516 = smul.u32 8, %s19
      %p517 = scmp.lt.s32.totalorder %s516, 15
      %s518 = scalar_select %p517, %s516, 15
      %s519 = smul.addr %s518, 4
      %s520 = scalar_lea.vmem %s2, %s519
      %p521 = scmp.lt.s32.totalorder %s19, 1
      %s522 = scalar_select %p521, %s19, 1
      %s523 = smul.addr %s522, 2
      %s524 = scalar_lea.vmem %s3, %s523
      // Predicated region
      $region37: #{residual_forward.4} parent=27 // pred_check
        %p525 = pneg %p99
      $region38: #{residual_forward.4} parent=27 // pred_check_branch
        %527 = sbr.rel (%p525) target = $region40
      $region39: #{residual_forward.4} parent=27 // pred_region
        %s528 = smul.u32 8, %s19
      $region40: #{residual_forward.4} parent=27 // pred_fallthru
        _
      // Predicated region
      $region41: #{residual_forward.4} parent=27 // pred_check
        %p529 = pneg %p125
      $region42: #{residual_forward.4} parent=27 // pred_check_branch
        %531 = sbr.rel (%p529) target = $region44
      $region43: #{residual_forward.4} parent=27 // pred_region
        _
      $region44: #{residual_forward.4} parent=27 // pred_fallthru
        _
    $region28: #{residual_forward.4} parent=5 // pred_fallthru
      _
    %p532 = scmp.le.s32.totalorder 2, %s10
    // Predicated region
    $region45: #{residual_forward.4} parent=5 // pred_check
      %p533 = pneg %p532
    $region46: #{residual_forward.4} parent=5 // pred_check_branch
      %535 = sbr.rel (%p533) target = $region48
    $region47: #{residual_forward.4} parent=5 // pred_region
      %s536 = ssub.s32 %s10, 2
      // Predicated region
      $region49: #{residual_forward.4} parent=47 // pred_check
        %p537 = pneg %p105
      $region50: #{residual_forward.4} parent=47 // pred_check_branch
        %539 = sbr.rel (%p537) target = $region52
      $region51: #{residual_forward.4} parent=47 // pred_region
        %s540 = smul.u32 8, %s21
        %p541 = scmp.lt.s32.totalorder %s540, 15
        %s542 = scalar_select %p541, %s540, 15
        %s543 = smul.addr %s542, 4
        %s544 = scalar_lea.vmem %s2, %s543
      $region52: #{residual_forward.4} parent=47 // pred_fallthru
        _
      // Predicated region
      $region53: #{residual_forward.4} parent=47 // pred_check
        %p545 = pneg %p131
      $region54: #{residual_forward.4} parent=47 // pred_check_branch
        %547 = sbr.rel (%p545) target = $region56
      $region55: #{residual_forward.4} parent=47 // pred_region
        %p548 = scmp.lt.s32.totalorder %s21, 1
        %s549 = scalar_select %p548, %s21, 1
        %s550 = smul.addr %s549, 2
        %s551 = scalar_lea.vmem %s3, %s550
      $region56: #{residual_forward.4} parent=47 // pred_fallthru
        _
    $region48: #{residual_forward.4} parent=5 // pred_fallthru
      _
  $region6: #{residual_forward.4} parent=0 // loop_footer
    %s14 = sadd.s32 1, %s10
  $region7: #{residual_forward.4} parent=0 // loop_footer_branch
    %9 = sbr.rel target = $region3
  $region8: #{residual_forward.4} parent=0 // loop_exit
    _

// kernel: residual_forward.7
$region0: #{residual_forward.7}
  #allocation0 [shape = 'u32[]', space=smem, size = 0x4, offset = 0x4, fixed_abs, tag = 'smem constant byte address 0x4 - core index']
  #allocation1 [shape = 'u32[144,128]{1,0:T(1,128)}', space=vmem, size = 0x12000, scoped, tag = 'internal scratch']
  %s0 = inlined_call_operand.vmem [shape: bf16[128,128], index: 0, kind: input, shape index: {}]
  %s1 = inlined_call_operand.vmem [shape: f32[1,128], index: 1, kind: input, shape index: {}]
  %s2 = inlined_call_operand.vmem [shape: f32[1,128], index: 2, kind: input, shape index: {}]
  %s3 = inlined_call_operand.vmem [shape: bf16[128,128], index: 3, kind: input, shape index: {}]
  %s4 = inlined_call_operand.vmem [shape: bf16[128,128], index: 4, kind: input, shape index: {}]
  %s5 = inlined_call_operand.vmem [shape: f32[1,128], index: 5, kind: input, shape index: {}]
  %s6 = inlined_call_operand.vmem [shape: f32[128,128], index: 6, kind: output, shape index: {}]
  %s7 = sld [smem:[#allocation0]]
  $region57: #{residual_forward.7} parent=0
    _
  %s9 = ssub.s32 1, %s7
  %s10 = scalar_select 0, %s9, %s7
  loop: start=0, step=1, limit=4
  $region2: #{residual_forward.7} parent=0 // loop_pre_header
    _
  $region3: #{residual_forward.7} parent=0 // loop_header
    %s12 = sphi 0, %s16
    %p13 = scmp.ge.s32.totalorder %s12, 4
    %s22 = sphi 0, %s24
    %s25 = sphi 0, %s22
    %s26 = sphi 0, %s25
    %s42 = sphi 0, %s26
    %s46 = sphi 0, %s46
    %s48 = sphi 0, %s46
    %s49 = sphi 0, %s48
    %s63 = sphi 0, %s49
    %s67 = sphi 0, %s67
    %s69 = sphi 0, %s67
    %s70 = sphi 0, %s69
    %s84 = sphi 0, %s70
    %s90 = sphi 0, %s92
    %s93 = sphi 0, %s90
    %s94 = sphi 0, %s93
    %s110 = sphi 0, %s94
    %s114 = sphi 0, %s114
    %s116 = sphi 0, %s114
    %s117 = sphi 0, %s116
    %s131 = sphi 0, %s117
    %s135 = sphi 0, %s135
    %s137 = sphi 0, %s135
    %s138 = sphi 0, %s137
    %s152 = sphi 0, %s138
    %s158 = sphi 0, %s160
    %s161 = sphi 0, %s158
    %s162 = sphi 0, %s161
    %s178 = sphi 0, %s162
  $region4: #{residual_forward.7} parent=0 // loop_header_branch
    %15 = sbr.rel (%p13) target = $region8
  $region5: #{residual_forward.7} parent=0 // loop_body
    %s17 = ssub.s32 %s12, 1
    %s18 = ssub.s32 %s12, 2
    %s19 = sadd.s32 %s12, 1
    %s20 = ssub.s32 %s12, %s19
    %p21 = scmp.eq.s32.totalorder %s20, 0
    %s23 = sadd.s32 %s22, 1
    %s24 = scalar_select %p21, %s22, %s23
    %p27 = pneg %p21
    %p28 = scmp.eq.s32.totalorder %s12, 1
    %p29 = por %p27, %p28
    %p30 = scmp.ne.s32.totalorder %s22, %s25
    %p31 = scmp.eq.s32.totalorder %s12, 0
    %p32 = por %p30, %p31
    %p33 = scmp.ne.s32.totalorder %s22, %s25
    %p34 = scmp.eq.s32.totalorder %s17, 1
    %p35 = por %p33, %p34
    %p36 = scmp.ne.s32.totalorder %s25, %s26
    %p37 = scmp.eq.s32.totalorder %s17, 0
    %p38 = por %p36, %p37
    %p39 = scmp.ne.s32.totalorder %s25, %s26
    %p40 = scmp.eq.s32.totalorder %s18, 1
    %p41 = por %p39, %p40
    %p43 = scmp.ne.s32.totalorder %s26, %s42
    %p44 = scmp.eq.s32.totalorder %s18, 0
    %p45 = por %p43, %p44
    %s47 = sadd.s32 %s46, 1
    %p50 = scmp.eq.s32.totalorder %s12, 1
    %p51 = scmp.ne.s32.totalorder %s46, %s48
    %p52 = scmp.eq.s32.totalorder %s12, 0
    %p53 = por %p51, %p52
    %p54 = scmp.ne.s32.totalorder %s46, %s48
    %p55 = scmp.eq.s32.totalorder %s17, 1
    %p56 = por %p54, %p55
    %p57 = scmp.ne.s32.totalorder %s48, %s49
    %p58 = scmp.eq.s32.totalorder %s17, 0
    %p59 = por %p57, %p58
    %p60 = scmp.ne.s32.totalorder %s48, %s49
    %p61 = scmp.eq.s32.totalorder %s18, 1
    %p62 = por %p60, %p61
    %p64 = scmp.ne.s32.totalorder %s49, %s63
    %p65 = scmp.eq.s32.totalorder %s18, 0
    %p66 = por %p64, %p65
    %s68 = sadd.s32 %s67, 1
    %p71 = scmp.eq.s32.totalorder %s12, 1
    %p72 = scmp.ne.s32.totalorder %s67, %s69
    %p73 = scmp.eq.s32.totalorder %s12, 0
    %p74 = por %p72, %p73
    %p75 = scmp.ne.s32.totalorder %s67, %s69
    %p76 = scmp.eq.s32.totalorder %s17, 1
    %p77 = por %p75, %p76
    %p78 = scmp.ne.s32.totalorder %s69, %s70
    %p79 = scmp.eq.s32.totalorder %s17, 0
    %p80 = por %p78, %p79
    %p81 = scmp.ne.s32.totalorder %s69, %s70
    %p82 = scmp.eq.s32.totalorder %s18, 1
    %p83 = por %p81, %p82
    %p85 = scmp.ne.s32.totalorder %s70, %s84
    %p86 = scmp.eq.s32.totalorder %s18, 0
    %p87 = por %p85, %p86
    %s88 = ssub.s32 %s12, %s19
    %p89 = scmp.eq.s32.totalorder %s88, 0
    %s91 = sadd.s32 %s90, 1
    %s92 = scalar_select %p89, %s90, %s91
    %p95 = pneg %p89
    %p96 = scmp.eq.s32.totalorder %s12, 1
    %p97 = por %p95, %p96
    %p98 = scmp.ne.s32.totalorder %s90, %s93
    %p99 = scmp.eq.s32.totalorder %s12, 0
    %p100 = por %p98, %p99
    %p101 = scmp.ne.s32.totalorder %s90, %s93
    %p102 = scmp.eq.s32.totalorder %s17, 1
    %p103 = por %p101, %p102
    %p104 = scmp.ne.s32.totalorder %s93, %s94
    %p105 = scmp.eq.s32.totalorder %s17, 0
    %p106 = por %p104, %p105
    %p107 = scmp.ne.s32.totalorder %s93, %s94
    %p108 = scmp.eq.s32.totalorder %s18, 1
    %p109 = por %p107, %p108
    %p111 = scmp.ne.s32.totalorder %s94, %s110
    %p112 = scmp.eq.s32.totalorder %s18, 0
    %p113 = por %p111, %p112
    %s115 = sadd.s32 %s114, 1
    %p118 = scmp.eq.s32.totalorder %s12, 1
    %p119 = scmp.ne.s32.totalorder %s114, %s116
    %p120 = scmp.eq.s32.totalorder %s12, 0
    %p121 = por %p119, %p120
    %p122 = scmp.ne.s32.totalorder %s114, %s116
    %p123 = scmp.eq.s32.totalorder %s17, 1
    %p124 = por %p122, %p123
    %p125 = scmp.ne.s32.totalorder %s116, %s117
    %p126 = scmp.eq.s32.totalorder %s17, 0
    %p127 = por %p125, %p126
    %p128 = scmp.ne.s32.totalorder %s116, %s117
    %p129 = scmp.eq.s32.totalorder %s18, 1
    %p130 = por %p128, %p129
    %p132 = scmp.ne.s32.totalorder %s117, %s131
    %p133 = scmp.eq.s32.totalorder %s18, 0
    %p134 = por %p132, %p133
    %s136 = sadd.s32 %s135, 1
    %p139 = scmp.eq.s32.totalorder %s12, 1
    %p140 = scmp.ne.s32.totalorder %s135, %s137
    %p141 = scmp.eq.s32.totalorder %s12, 0
    %p142 = por %p140, %p141
    %p143 = scmp.ne.s32.totalorder %s135, %s137
    %p144 = scmp.eq.s32.totalorder %s17, 1
    %p145 = por %p143, %p144
    %p146 = scmp.ne.s32.totalorder %s137, %s138
    %p147 = scmp.eq.s32.totalorder %s17, 0
    %p148 = por %p146, %p147
    %p149 = scmp.ne.s32.totalorder %s137, %s138
    %p150 = scmp.eq.s32.totalorder %s18, 1
    %p151 = por %p149, %p150
    %p153 = scmp.ne.s32.totalorder %s138, %s152
    %p154 = scmp.eq.s32.totalorder %s18, 0
    %p155 = por %p153, %p154
    %s156 = ssub.s32 %s12, %s19
    %p157 = scmp.eq.s32.totalorder %s156, 0
    %s159 = sadd.s32 %s158, 1
    %s160 = scalar_select %p157, %s158, %s159
    %p163 = pneg %p157
    %p164 = scmp.eq.s32.totalorder %s12, 1
    %p165 = por %p163, %p164
    %p166 = scmp.ne.s32.totalorder %s158, %s161
    %p167 = scmp.eq.s32.totalorder %s12, 0
    %p168 = por %p166, %p167
    %p169 = scmp.ne.s32.totalorder %s158, %s161
    %p170 = scmp.eq.s32.totalorder %s17, 1
    %p171 = por %p169, %p170
    %p172 = scmp.ne.s32.totalorder %s161, %s162
    %p173 = scmp.eq.s32.totalorder %s17, 0
    %p174 = por %p172, %p173
    %p175 = scmp.ne.s32.totalorder %s161, %s162
    %p176 = scmp.eq.s32.totalorder %s18, 1
    %p177 = por %p175, %p176
    %p179 = scmp.ne.s32.totalorder %s162, %s178
    %p180 = scmp.eq.s32.totalorder %s18, 0
    %p181 = por %p179, %p180
    %p182 = scmp.le.s32.totalorder 1, %s12
    %p183 = scmp.lt.s32.totalorder %s12, 3
    %p184 = pnand %p182, %p183
    %p185 = pneg %p184
    // Predicated region
    $region9: #{residual_forward.7} parent=5 // pred_check
      _
    $region10: #{residual_forward.7} parent=5 // pred_check_branch
      %187 = sbr.rel (%p184) target = $region12
    $region11: #{residual_forward.7} parent=5 // pred_region
      %s188 = ssub.s32 %s12, 1
      // Predicated region
      $region13: #{residual_forward.7} parent=11 // pred_check
        %p189 = pneg %p59
      $region14: #{residual_forward.7} parent=11 // pred_check_branch
        %191 = sbr.rel (%p189) target = $region16
      $region15: #{residual_forward.7} parent=11 // pred_region
        _
      $region16: #{residual_forward.7} parent=11 // pred_fallthru
        _
      // Predicated region
      $region17: #{residual_forward.7} parent=11 // pred_check
        %p192 = pneg %p80
      $region18: #{residual_forward.7} parent=11 // pred_check_branch
        %194 = sbr.rel (%p192) target = $region20
      $region19: #{residual_forward.7} parent=11 // pred_region
        _
      $region20: #{residual_forward.7} parent=11 // pred_fallthru
        _
      // Predicated region
      $region21: #{residual_forward.7} parent=11 // pred_check
        %p195 = pneg %p127
      $region22: #{residual_forward.7} parent=11 // pred_check_branch
        %197 = sbr.rel (%p195) target = $region24
      $region23: #{residual_forward.7} parent=11 // pred_region
        _
      $region24: #{residual_forward.7} parent=11 // pred_fallthru
        _
      // Predicated region
      $region25: #{residual_forward.7} parent=11 // pred_check
        %p198 = pneg %p148
      $region26: #{residual_forward.7} parent=11 // pred_check_branch
        %200 = sbr.rel (%p198) target = $region28
      $region27: #{residual_forward.7} parent=11 // pred_region
        _
      $region28: #{residual_forward.7} parent=11 // pred_fallthru
        _
    $region12: #{residual_forward.7} parent=5 // pred_fallthru
      _
    %p201 = scmp.lt.s32.totalorder %s12, 2
    // Predicated region
    $region29: #{residual_forward.7} parent=5 // pred_check
      %p202 = pneg %p201
    $region30: #{residual_forward.7} parent=5 // pred_check_branch
      %204 = sbr.rel (%p202) target = $region32
    $region31: #{residual_forward.7} parent=5 // pred_region
      // Predicated region
      $region33: #{residual_forward.7} parent=31 // pred_check
        %p205 = pneg %p32
      $region34: #{residual_forward.7} parent=31 // pred_check_branch
        %207 = sbr.rel (%p205) target = $region36
      $region35: #{residual_forward.7} parent=31 // pred_region
        %s208 = smul.u32 8, %s12
        %p209 = scmp.lt.s32.totalorder %s208, 15
        %s210 = scalar_select %p209, %s208, 15
        %s211 = smul.addr %s210, 4
        %s212 = scalar_lea.vmem %s0, %s211
        %s213 = smul.u32 8, %s12
      $region36: #{residual_forward.7} parent=31 // pred_fallthru
        _
      // Predicated region
      $region37: #{residual_forward.7} parent=31 // pred_check
        %p214 = pneg %p100
      $region38: #{residual_forward.7} parent=31 // pred_check_branch
        %216 = sbr.rel (%p214) target = $region40
      $region39: #{residual_forward.7} parent=31 // pred_region
        %s217 = smul.u32 8, %s12
        %p218 = scmp.lt.s32.totalorder %s217, 15
        %s219 = scalar_select %p218, %s217, 15
        %s220 = smul.addr %s219, 4
        %s221 = scalar_lea.vmem %s3, %s220
        %s222 = smul.u32 8, %s12
      $region40: #{residual_forward.7} parent=31 // pred_fallthru
        _
    $region32: #{residual_forward.7} parent=5 // pred_fallthru
      _
    %p223 = scmp.le.s32.totalorder 1, %s12
    %p224 = scmp.lt.s32.totalorder %s12, 3
    %p225 = pnand %p223, %p224
    %p226 = pneg %p225
    // Predicated region
    $region41: #{residual_forward.7} parent=5 // pred_check
      _
    $region42: #{residual_forward.7} parent=5 // pred_check_branch
      %228 = sbr.rel (%p225) target = $region44
    $region43: #{residual_forward.7} parent=5 // pred_region
      %s229 = ssub.s32 %s12, 1
      %s230 = smul.u32 8, %s17
      %p231 = scmp.lt.s32.totalorder %s230, 15
      %s232 = scalar_select %p231, %s230, 15
      %s233 = smul.addr %s232, 4
      %s234 = scalar_lea.vmem %s0, %s233
      %p235 = pneg %p38
      %p236 = pneg %p35
      %p237 = pneg %p59
      %p238 = pneg %p56
      %p239 = pneg %p80
      %p240 = pneg %p77
      %s241 = smul.u32 8, %s17
      %p242 = scmp.lt.s32.totalorder %s241, 15
      %s243 = scalar_select %p242, %s241, 15
      %s244 = smul.addr %s243, 4
      %s245 = scalar_lea.vmem %s3, %s244
      %p246 = pneg %p106
      %p247 = pneg %p103
      %p248 = pneg %p127
      %p249 = pneg %p124
      %p250 = pneg %p148
      %p251 = pneg %p145
      %p252 = pneg %p174
      %p253 = pneg %p171
      %s254 = smul.u32 8, %s17
      %p255 = scmp.lt.s32.totalorder %s254, 15
      %s256 = scalar_select %p255, %s254, 15
      %s257 = smul.addr %s256, 8
      %s258 = scalar_lea.vmem %s6, %s257
      %s259 = smul.u32 8, %s17
      %p260 = scmp.lt.s32.totalorder %s259, 15
      %s261 = scalar_select %p260, %s259, 15
      %s262 = smul.addr %s261, 4
      %s263 = scalar_lea.vmem %s0, %s262
      %s264 = smul.u32 8, %s17
      %s265 = smul.u32 8, %s17
      %p266 = scmp.lt.s32.totalorder %s265, 15
      %s267 = scalar_select %p266, %s265, 15
      %s268 = smul.addr %s267, 4
      %s269 = scalar_lea.vmem %s3, %s268
      %s270 = smul.u32 8, %s17
      %s271 = smul.u32 8, %s17
      %p272 = scmp.lt.s32.totalorder %s271, 15
      %s273 = scalar_select %p272, %s271, 15
      %s274 = smul.addr %s273, 8
      %s275 = scalar_lea.vmem %s6, %s274
      %s276 = smul.u32 8, %s17
      %v278 = vld [vmem:[%s263] sm:$0xf]
      %v279 = vld [vmem:[%s263 + $0x4] sm:$0xf]
      %v280 = vld [vmem:[%s263 + $0x8] sm:$0xf]
      %v281 = vld [vmem:[%s263 + $0xc] sm:$0xf]
      %v282 = vld [vmem:[%s263 + $0x10] sm:$0xf]
      %v283 = vld [vmem:[%s263 + $0x14] sm:$0xf]
      %v284 = vld [vmem:[%s263 + $0x18] sm:$0xf]
      %v285 = vld [vmem:[%s263 + $0x1c] sm:$0xf]
      %v286 = vunpack.c.l.bf16 %v278
      %v287 = vunpack.c.l.bf16 %v279
      %v288 = vunpack.c.l.bf16 %v280
      %v289 = vunpack.c.l.bf16 %v281
      %v290 = vunpack.c.l.bf16 %v282
      %v291 = vunpack.c.l.bf16 %v283
      %v292 = vunpack.c.l.bf16 %v284
      %v293 = vunpack.c.l.bf16 %v285
      %v294 = vld [vmem:[%s1] sm:$0x1]
      %v296 = vlaneseq
      %v297 = vshrl.u32 %v296, 7
      %v298 = vsub.s32 0, %v297
      %v299 = vrot.slane %v294, %v298
      %v301 = vmul.f32 %v286, %v299
      %v302 = vmul.f32 %v287, %v299
      %v303 = vmul.f32 %v288, %v299
      %v304 = vmul.f32 %v289, %v299
      %v305 = vmul.f32 %v290, %v299
      %v306 = vmul.f32 %v291, %v299
      %v307 = vmul.f32 %v292, %v299
      %v308 = vmul.f32 %v293, %v299
      %v309 = vld [vmem:[%s2] sm:$0x1]
      %v311 = vlaneseq
      %v312 = vshrl.u32 %v311, 7
      %v313 = vsub.s32 0, %v312
      %v314 = vrot.slane %v309, %v313
      %v316 = vadd.f32 %v301, %v314
      %v317 = vadd.f32 %v302, %v314
      %v318 = vadd.f32 %v303, %v314
      %v319 = vadd.f32 %v304, %v314
      %v320 = vadd.f32 %v305, %v314
      %v321 = vadd.f32 %v306, %v314
      %v322 = vadd.f32 %v307, %v314
      %v323 = vadd.f32 %v308, %v314
      %v324 = vld [vmem:[%s269] sm:$0xf]
      %v325 = vld [vmem:[%s269 + $0x4] sm:$0xf]
      %v326 = vld [vmem:[%s269 + $0x8] sm:$0xf]
      %v327 = vld [vmem:[%s269 + $0xc] sm:$0xf]
      %v328 = vld [vmem:[%s269 + $0x10] sm:$0xf]
      %v329 = vld [vmem:[%s269 + $0x14] sm:$0xf]
      %v330 = vld [vmem:[%s269 + $0x18] sm:$0xf]
      %v331 = vld [vmem:[%s269 + $0x1c] sm:$0xf]
      %v332 = vld [vmem:[%s4] sm:$0xf]
      %v333 = vld [vmem:[%s4 + $0x4] sm:$0xf]
      %v334 = vld [vmem:[%s4 + $0x8] sm:$0xf]
      %v335 = vld [vmem:[%s4 + $0xc] sm:$0xf]
      %v336 = vld [vmem:[%s4 + $0x10] sm:$0xf]
      %v337 = vld [vmem:[%s4 + $0x14] sm:$0xf]
      %v338 = vld [vmem:[%s4 + $0x18] sm:$0xf]
      %v339 = vld [vmem:[%s4 + $0x1c] sm:$0xf]
      %v340 = vld [vmem:[%s4 + $0x20] sm:$0xf]
      %v341 = vld [vmem:[%s4 + $0x24] sm:$0xf]
      %v342 = vld [vmem:[%s4 + $0x28] sm:$0xf]
      %v343 = vld [vmem:[%s4 + $0x2c] sm:$0xf]
      %v344 = vld [vmem:[%s4 + $0x30] sm:$0xf]
      %v345 = vld [vmem:[%s4 + $0x34] sm:$0xf]
      %v346 = vld [vmem:[%s4 + $0x38] sm:$0xf]
      %v347 = vld [vmem:[%s4 + $0x3c] sm:$0xf]
      %v348 = vld [vmem:[%s5] sm:$0x1]
      %v350 = vlaneseq
      %v351 = vshrl.u32 %v350, 7
      %v352 = vsub.s32 0, %v351
      %v353 = vrot.slane %v348, %v352
      %v363 = vunpack.c.l.b16 %v324
      %v364 = vunpack.c.l.b16 %v325
      %v365 = vunpack.c.l.b16 %v326
      %v366 = vunpack.c.l.b16 %v327
      %v367 = vunpack.c.l.b16 %v328
      %v368 = vunpack.c.l.b16 %v329
      %v369 = vunpack.c.l.b16 %v330
      %v370 = vunpack.c.l.b16 %v331
      %v371 = vpack.c.b16 %v364, %v363
      %v372 = vpack.c.b16 %v366, %v365
      %v373 = vpack.c.b16 %v368, %v367
      %v374 = vpack.c.b16 %v370, %v369
      %v395 = vunpack.c.l.b16 %v332
      %v396 = vunpack.c.l.b16 %v333
      %v397 = vunpack.c.l.b16 %v334
      %v398 = vunpack.c.l.b16 %v335
      %v399 = vunpack.c.l.b16 %v336
      %v400 = vunpack.c.l.b16 %v337
      %v401 = vunpack.c.l.b16 %v338
      %v402 = vunpack.c.l.b16 %v339
      %v403 = vunpack.c.l.b16 %v340
      %v404 = vunpack.c.l.b16 %v341
      %v405 = vunpack.c.l.b16 %v342
      %v406 = vunpack.c.l.b16 %v343
      %v407 = vunpack.c.l.b16 %v344
      %v408 = vunpack.c.l.b16 %v345
      %v409 = vunpack.c.l.b16 %v346
      %v410 = vunpack.c.l.b16 %v347
      %v411 = vpack.c.b16 %v396, %v395
      %v412 = vpack.c.b16 %v398, %v397
      %v413 = vpack.c.b16 %v400, %v399
      %v414 = vpack.c.b16 %v402, %v401
      %v415 = vpack.c.b16 %v404, %v403
      %v416 = vpack.c.b16 %v406, %v405
      %v417 = vpack.c.b16 %v408, %v407
      %v418 = vpack.c.b16 %v410, %v409
      %427 = vmatprep.subr.bf16.mxu0 0
      %428 = vmatpush1.bf16.msra.mxu0 %v411
      %429 = vmatprep.subr.bf16.mxu0 0
      %430 = vmatpush1.bf16.msra.mxu0 %v412
      %431 = vmatprep.subr.bf16.mxu0 0
      %432 = vmatpush1.bf16.msra.mxu0 %v413
      %433 = vmatprep.subr.bf16.mxu0 0
      %434 = vmatpush1.bf16.msra.mxu0 %v414
      %435 = vmatprep.subr.bf16.mxu0 0
      %436 = vmatpush1.bf16.msra.mxu0 %v415
      %437 = vmatprep.subr.bf16.mxu0 0
      %438 = vmatpush1.bf16.msra.mxu0 %v416
      %439 = vmatprep.subr.bf16.mxu0 0
      %440 = vmatpush1.bf16.msra.mxu0 %v417
      %441 = vmatprep.subr.bf16.mxu0 0
      %442 = vmatpush1.bf16.msra.mxu0 %v418
      %443 = vmatprep.subr.bf16.mxu0 0
      %444 = vmatpush1.bf16.msra.mxu0 0
      %445 = vmatprep.subr.bf16.mxu0 0
      %446 = vmatpush1.bf16.msra.mxu0 0
      %447 = vmatprep.subr.bf16.mxu0 0
      %448 = vmatpush1.bf16.msra.mxu0 0
      %449 = vmatprep.subr.bf16.mxu0 0
      %450 = vmatpush1.bf16.msra.mxu0 0
      %451 = vmatprep.subr.bf16.mxu0 0
      %452 = vmatpush1.bf16.msra.mxu0 0
      %453 = vmatprep.subr.bf16.mxu0 0
      %454 = vmatpush1.bf16.msra.mxu0 0
      %455 = vmatprep.subr.bf16.mxu0 0
      %456 = vmatpush1.bf16.msra.mxu0 0
      %457 = vmatprep.subr.bf16.mxu0 0
      %458 = vmatpush1.bf16.msra.mxu0 0
      %459 = vmatprep.mubr.bf16.mxu0 0
      %460 = vmatmul.mubr.bf16.gmra.mrb[0].mxu0 %v371
      %v461 = vpop.f32.mrb[0].mxu0
      %v462 = vadd.f32 %v353, %v461
      %v463 = vpop.f32.mrb[0].mxu0
      %v464 = vpop.f32.mrb[0].mxu0
      %v465 = vadd.f32 %v353, %v464
      %v466 = vpop.f32.mrb[0].mxu0
      %467 = vmatprep.mubr.bf16.mxu0 0
      %468 = vmatmul.mubr.bf16.gmra.mrb[0].mxu0 %v372
      %v469 = vpop.f32.mrb[0].mxu0
      %v470 = vadd.f32 %v353, %v469
      %v471 = vpop.f32.mrb[0].mxu0
      %v472 = vpop.f32.mrb[0].mxu0
      %v473 = vadd.f32 %v353, %v472
      %v474 = vpop.f32.mrb[0].mxu0
      %475 = vmatprep.mubr.bf16.mxu0 0
      %476 = vmatmul.mubr.bf16.gmra.mrb[0].mxu0 %v373
      %v477 = vpop.f32.mrb[0].mxu0
      %v478 = vadd.f32 %v353, %v477
      %v479 = vpop.f32.mrb[0].mxu0
      %v480 = vpop.f32.mrb[0].mxu0
      %v481 = vadd.f32 %v353, %v480
      %v482 = vpop.f32.mrb[0].mxu0
      %483 = vmatprep.mubr.bf16.mxu0 0
      %484 = vmatmul.mubr.bf16.gmra.mrb[0].mxu0 %v374
      %v485 = vpop.f32.mrb[0].mxu0
      %v486 = vadd.f32 %v353, %v485
      %v487 = vpop.f32.mrb[0].mxu0
      %v488 = vpop.f32.mrb[0].mxu0
      %v489 = vadd.f32 %v353, %v488
      %v490 = vpop.f32.mrb[0].mxu0
      %491 = vdwg.mxu0
      %v492 = vadd.f32 %v316, %v462
      %v493 = vadd.f32 %v317, %v465
      %v494 = vadd.f32 %v318, %v470
      %v495 = vadd.f32 %v319, %v473
      %v496 = vadd.f32 %v320, %v478
      %v497 = vadd.f32 %v321, %v481
      %v498 = vadd.f32 %v322, %v486
      %v499 = vadd.f32 %v323, %v489
      %v500 = vmax.f32 %v492, 0.0
      %v501 = vmax.f32 %v493, 0.0
      %v502 = vmax.f32 %v494, 0.0
      %v503 = vmax.f32 %v495, 0.0
      %v504 = vmax.f32 %v496, 0.0
      %v505 = vmax.f32 %v497, 0.0
      %v506 = vmax.f32 %v498, 0.0
      %v507 = vmax.f32 %v499, 0.0
      %508 = vst [vmem:[%s275] sm:$0xff] %v500
      %509 = vst [vmem:[%s275 + $0x8] sm:$0xff] %v501
      %510 = vst [vmem:[%s275 + $0x10] sm:$0xff] %v502
      %511 = vst [vmem:[%s275 + $0x18] sm:$0xff] %v503
      %512 = vst [vmem:[%s275 + $0x20] sm:$0xff] %v504
      %513 = vst [vmem:[%s275 + $0x28] sm:$0xff] %v505
      %514 = vst [vmem:[%s275 + $0x30] sm:$0xff] %v506
      %515 = vst [vmem:[%s275 + $0x38] sm:$0xff] %v507
      %s516 = smul.u32 8, %s17
      %p517 = scmp.lt.s32.totalorder %s516, 15
      %s518 = scalar_select %p517, %s516, 15
      %s519 = smul.addr %s518, 8
      %s520 = scalar_lea.vmem %s6, %s519
      // Predicated region
      $region45: #{residual_forward.7} parent=43 // pred_check
        %p521 = pneg %p171
      $region46: #{residual_forward.7} parent=43 // pred_check_branch
        %523 = sbr.rel (%p521) target = $region48
      $region47: #{residual_forward.7} parent=43 // pred_region
        %s524 = smul.u32 8, %s17
      $region48: #{residual_forward.7} parent=43 // pred_fallthru
        _
    $region44: #{residual_forward.7} parent=5 // pred_fallthru
      _
    %p525 = scmp.le.s32.totalorder 2, %s12
    // Predicated region
    $region49: #{residual_forward.7} parent=5 // pred_check
      %p526 = pneg %p525
    $region50: #{residual_forward.7} parent=5 // pred_check_branch
      %528 = sbr.rel (%p526) target = $region52
    $region51: #{residual_forward.7} parent=5 // pred_region
      %s529 = ssub.s32 %s12, 2
      // Predicated region
      $region53: #{residual_forward.7} parent=51 // pred_check
        %p530 = pneg %p177
      $region54: #{residual_forward.7} parent=51 // pred_check_branch
        %532 = sbr.rel (%p530) target = $region56
      $region55: #{residual_forward.7} parent=51 // pred_region
        %s533 = smul.u32 8, %s18
        %p534 = scmp.lt.s32.totalorder %s533, 15
        %s535 = scalar_select %p534, %s533, 15
        %s536 = smul.addr %s535, 8
        %s537 = scalar_lea.vmem %s6, %s536
      $region56: #{residual_forward.7} parent=51 // pred_fallthru
        _
    $region52: #{residual_forward.7} parent=5 // pred_fallthru
      _
  $region6: #{residual_forward.7} parent=0 // loop_footer
    %s16 = sadd.s32 1, %s12
  $region7: #{residual_forward.7} parent=0 // loop_footer_branch
    %11 = sbr.rel target = $region3
  $region8: #{residual_forward.7} parent=0 // loop_exit
    _

</llo_original>
